<compile_context>
chip_gen: v5e
topology: v5e:2x2
jax: 0.10.0
libtpu: 0.0.40
codegen_flags: <defaults>
</compile_context>

<pallas_src>
import functools

import jax
import jax.numpy as jnp
from jax import lax
from jax.experimental import pallas as pl
from jax.experimental.pallas import tpu as pltpu


# ----------------------------------------------------------------------------
# Kernel
# ----------------------------------------------------------------------------
def _bottleneck_kernel(x_ref, w1_ref, w2_ref, w3_ref,
                       b1_ref, b2_ref, b3_ref, o_ref, *, nb, hh, ww):
    M, Cin = x_ref.shape                    # M = nb * hh * ww
    width_p = w1_ref.shape[1]               # lane-padded bottleneck width
    Cout = w3_ref.shape[1]

    x2d = x_ref[...]                        # (M, Cin) bf16

    # ---- conv1 (1x1, BN1 scale folded into w1) + bias + ReLU ---------------
    h1 = jnp.dot(x2d, w1_ref[...], preferred_element_type=jnp.float32)
    h1 = jnp.maximum(h1 + b1_ref[...], 0.0)                 # (M, width_p) f32

    # ---- conv2 (3x3, stride=1, pad=1, BN2 folded) --------------------------
    # Zero-pad in registers (only the halo is new data; no persistent scratch
    # and no full buffer zero-fill per grid step).  For each kh, build one
    # lane-concatenated (M, 3*width_p) patch and do a single matmul against
    # the pre-reshaped (3*width_p, width_p) weight slab -> 3 MXU issues total.
    h1_4d = h1.reshape(nb, hh, ww, width_p)
    zcol = jnp.zeros((nb, hh, 1, width_p), jnp.float32)
    zrow = jnp.zeros((nb, 1, ww + 2, width_p), jnp.float32)
    hp = jnp.concatenate([zcol, h1_4d, zcol], axis=2)        # (nb, hh,   ww+2, w_p)
    hp = jnp.concatenate([zrow, hp, zrow], axis=1)           # (nb, hh+2, ww+2, w_p)

    acc = None                              # initialised from kh=0 (no zero-fill)
    for kh in range(3):
        rows = hp[:, kh:kh + hh]                             # leading-axis slice
        patch = jnp.concatenate(
            [rows[:, :, kw:kw + ww, :] for kw in range(3)], axis=-1)
        part = jnp.dot(patch.reshape(M, 3 * width_p).astype(jnp.bfloat16),
                       w2_ref[kh], preferred_element_type=jnp.float32)
        acc = part if acc is None else acc + part
    h2 = jnp.maximum(acc + b2_ref[...], 0.0)                 # (M, width_p) f32

    # ---- conv3 (1x1, BN3 folded) + bias -------------------------------------
    h3 = jnp.dot(h2.astype(jnp.bfloat16), w3_ref[...],
                 preferred_element_type=jnp.float32)
    h3 = h3 + b3_ref[...]

    # ---- identity residual (f32) + ReLU -------------------------------------
    out = jnp.maximum(h3 + x2d.astype(jnp.float32), 0.0)
    o_ref[...] = out.astype(o_ref.dtype)


# ----------------------------------------------------------------------------
# VMEM / block sizing (generation-aware)
# ----------------------------------------------------------------------------
def _vmem_capacity_bytes():
    try:
        return int(pltpu.get_tpu_info().vmem_capacity_bytes)
    except Exception:
        return 64 * 1024 * 1024        # conservative default (v7x per-TensorCore)


def _block_vmem_bytes(nb, H, W, Cin, width_p, Cout):
    """Rough per-grid-step VMEM bytes: double-buffered bf16 I/O blocks,
    double-buffered bf16 weights/biases, plus the kernel's live f32
    intermediates (h1, zero-padded h1, two im2col patches, acc, h3/out)."""
    M = nb * H * W
    Mp = nb * (H + 2) * (W + 2)
    io = 2 * (M * Cin * 2) + 2 * (M * Cout * 2)
    wgt = 2 * 2 * (Cin * width_p + 9 * width_p * width_p
                   + width_p * Cout + 2 * width_p + Cout)
    inter = 4 * (M * width_p            # h1
                 + Mp * width_p         # zero-padded h1
                 + 2 * M * 3 * width_p  # two live im2col patches
                 + M * width_p          # acc
                 + 2 * M * Cout)        # h3 / out
    return io + wgt + inter


def _pick_batch_block(N, H, W, Cin, width_p, Cout, budget_bytes):
    """Largest divisor of N that fits the VMEM budget while keeping the grid
    at >= 2 steps (so both v7x TensorCores get work) whenever N >= 2."""
    best = 1
    max_nb = N if N == 1 else N // 2
    for nb in range(1, max_nb + 1):
        if N % nb:
            continue
        if _block_vmem_bytes(nb, H, W, Cin, width_p, Cout) <= budget_bytes:
            best = nb
    return best


# ----------------------------------------------------------------------------
# Forward wrappers
# ----------------------------------------------------------------------------
def bottleneck_forward_nhwc(x_nhwc, fused_params, *, batch_block=None):
    """x_nhwc: (N, H, W, Cin), any float dtype (cast to bf16 at the boundary).
    Returns (N, H, W, Cout) in bf16.  This is the fast path: keep the whole
    model NHWC/bf16 so no per-layer transposes or up/down-casts are needed."""
    w1, w2k, w3, b1, b2, b3 = fused_params
    N, H, W, Cin = x_nhwc.shape
    width_p = w1.shape[1]
    Cout = w3.shape[1]
    assert Cin == Cout, "identity skip requires inplanes == planes * expansion"

    cap = _vmem_capacity_bytes()
    vmem_limit = cap * 3 // 4          # ~48 MiB on v7x (64 MiB), ~96 MiB on v5e/v6e
    budget = int(vmem_limit * 0.85)    # leave headroom for compiler scratch

    nb = batch_block or _pick_batch_block(N, H, W, Cin, width_p, Cout, budget)
    assert N % nb == 0
    Mb = nb * H * W

    # Contiguous (free) reshape to a lane-last 2-D view; bf16 at the boundary.
    x2d = x_nhwc.astype(jnp.bfloat16).reshape(N * H * W, Cin)

    def rep(shape):                    # replicated (grid-invariant) operand
        return pl.BlockSpec(shape, lambda n: (0,) * len(shape))

    kernel = functools.partial(_bottleneck_kernel, nb=nb, hh=H, ww=W)

    out2d = pl.pallas_call(
        kernel,
        out_shape=jax.ShapeDtypeStruct((N * H * W, Cout), jnp.bfloat16),
        grid_spec=pltpu.PrefetchScalarGridSpec(
            num_scalar_prefetch=0,
            grid=(N // nb,),
            in_specs=[
                pl.BlockSpec((Mb, Cin), lambda n: (n, 0)),   # activations (bf16)
                rep((Cin, width_p)),                         # w1 : 1x1 (BN1 folded)
                rep((3, 3 * width_p, width_p)),              # w2 : 3x3 per-kh slabs
                rep((width_p, Cout)),                        # w3 : 1x1 (BN3 folded)
                rep((1, width_p)),                           # bn1 bias (f32)
                rep((1, width_p)),                           # bn2 bias (f32)
                rep((1, Cout)),                              # bn3 bias (f32)
            ],
            out_specs=pl.BlockSpec((Mb, Cout), lambda n: (n, 0)),
        ),
        compiler_params=pltpu.CompilerParams(
            dimension_semantics=("parallel",),               # batch blocks independent
            vmem_limit_bytes=int(vmem_limit)),
    )(x2d, w1, w2k, w3, b1, b2, b3)

    return out2d.reshape(N, H, W, Cout)


def bottleneck_forward_nchw(x_nchw, fused_params, **kwargs):
    """PyTorch-convention wrapper (NCHW f32 in / NCHW f32 out).  Only for
    interface parity and testing; in a real NHWC/bf16 model call
    bottleneck_forward_nhwc directly so no per-layer transposes are emitted."""
    x_nhwc = jnp.transpose(x_nchw, (0, 2, 3, 1))
    out = bottleneck_forward_nhwc(x_nhwc, fused_params, **kwargs)
    return jnp.transpose(out, (0, 3, 1, 2)).astype(x_nchw.dtype)


# ----------------------------------------------------------------------------
# Parameters
# ----------------------------------------------------------------------------
def make_params(key, inplanes, planes, base_width=64, groups=1, eps=1e-5):
    """Raw parameters in the same form as the PyTorch module (f32)."""
    width = int(planes * (base_width / 64.0)) * groups
    cout = planes * 4  # Bottleneck.expansion
    ks = jax.random.split(key, 16)

    w1 = 0.1 * jax.random.normal(ks[0], (inplanes, width), jnp.float32)
    w2 = 0.1 * jax.random.normal(ks[1], (3, 3, width, width), jnp.float32)
    w3 = 0.1 * jax.random.normal(ks[2], (width, cout), jnp.float32)

    def bn(kg, kb, km, kv, c):
        gamma = 1.0 + 0.1 * jax.random.normal(kg, (1, c), jnp.float32)
        beta = 0.1 * jax.random.normal(kb, (1, c), jnp.float32)
        mean = 0.1 * jax.random.normal(km, (1, c), jnp.float32)
        var = jnp.abs(1.0 + 0.1 * jax.random.normal(kv, (1, c), jnp.float32))
        scale = gamma / jnp.sqrt(var + eps)
        bias = beta - mean * scale
        return scale, bias

    s1, b1 = bn(ks[3], ks[4], ks[5], ks[6], width)
    s2, b2 = bn(ks[7], ks[8], ks[9], ks[10], width)
    s3, b3 = bn(ks[11], ks[12], ks[13], ks[14], cout)
    return (w1, w2, w3, s1, b1, s2, b2, s3, b3)


def prepare_params(raw_params, weight_dtype=jnp.bfloat16, lane=128):
    """Fold BN scales into the conv weights once (not per call), zero-pad the
    internal `width` channel dim to a lane multiple (128) so all intermediates
    and the 3x3 weight slabs are lane-dense, and cast MXU operands to bf16.
    Padded channels stay exactly zero through ReLU, so results are unchanged.
    Biases stay f32."""
    w1, w2, w3, s1, b1, s2, b2, s3, b3 = raw_params
    width = w1.shape[1]
    width_p = ((width + lane - 1) // lane) * lane
    pad = width_p - width

    w1f = jnp.pad(w1 * s1, ((0, 0), (0, pad)))                  # (Cin, width_p)
    w2f = jnp.pad(w2 * s2, ((0, 0), (0, 0), (0, pad), (0, pad)))  # (3,3,w_p,w_p)
    w3f = jnp.pad(w3 * s3, ((0, pad), (0, 0)))                  # (width_p, Cout)
    b1f = jnp.pad(b1, ((0, 0), (0, pad)))
    b2f = jnp.pad(b2, ((0, 0), (0, pad)))

    w2k = w2f.reshape(3, 3 * width_p, width_p)                  # per-kh slabs
    return (w1f.astype(weight_dtype), w2k.astype(weight_dtype),
            w3f.astype(weight_dtype),
            b1f.astype(jnp.float32), b2f.astype(jnp.float32),
            b3.astype(jnp.float32))


# ----------------------------------------------------------------------------
# Pure-JAX f32 reference (lax.conv) for the correctness check
# ----------------------------------------------------------------------------
def reference_forward(x_nchw, raw_params):
    w1, w2, w3, s1, b1, s2, b2, s3, b3 = raw_params
    x = jnp.transpose(x_nchw, (0, 2, 3, 1))  # NHWC
    dn = ("NHWC", "HWIO", "NHWC")

    h = lax.conv_general_dilated(x, w1[None, None], (1, 1), "VALID",
                                 dimension_numbers=dn)
    h = jnp.maximum(h * s1[0] + b1[0], 0.0)
    h = lax.conv_general_dilated(h, w2, (1, 1), ((1, 1), (1, 1)),
                                 dimension_numbers=dn)
    h = jnp.maximum(h * s2[0] + b2[0], 0.0)
    h = lax.conv_general_dilated(h, w3[None, None], (1, 1), "VALID",
                                 dimension_numbers=dn)
    h = h * s3[0] + b3[0]
    out = jnp.maximum(h + x, 0.0)
    return jnp.transpose(out, (0, 3, 1, 2))


if __name__ == "__main__":
    # Small Bottleneck: inplanes=32, planes=8 -> width=8, out channels=32
    # (identity skip requires inplanes == planes * expansion).
    N, INPLANES, PLANES, H, W = 2, 32, 8, 8, 8

    key = jax.random.PRNGKey(0)
    k_x, k_p = jax.random.split(key)
    x = jax.random.normal(k_x, (N, INPLANES, H, W), jnp.float32)
    raw_params = make_params(k_p, INPLANES, PLANES)
    fused_params = prepare_params(raw_params)

    out = bottleneck_forward_nchw(x, fused_params)
    out = jax.block_until_ready(out)

    ref = reference_forward(x, raw_params)
    assert out.shape == (N, PLANES * 4, H, W)
    max_err = float(jnp.max(jnp.abs(out - ref)))
    # bf16 boundary activations + bf16 MXU operands (f32 accumulation)
    # -> looser tolerance than pure f32.
    assert jnp.allclose(out, ref, rtol=4e-2, atol=4e-2), max_err

    print("KERNEL_OK")
</pallas_src>

<mosaic_0001>
module attributes {stable_mosaic.version = 11 : i64} {
  func.func @_bottleneck_kernel(%arg0: i32, %arg1: memref<64x32xbf16, #tpu.memory_space<vmem>>, %arg2: memref<32x128xbf16, #tpu.memory_space<vmem>>, %arg3: memref<3x384x128xbf16, #tpu.memory_space<vmem>>, %arg4: memref<128x32xbf16, #tpu.memory_space<vmem>>, %arg5: memref<1x128xf32, #tpu.memory_space<vmem>>, %arg6: memref<1x128xf32, #tpu.memory_space<vmem>>, %arg7: memref<1x32xf32, #tpu.memory_space<vmem>>, %arg8: memref<64x32xbf16, #tpu.memory_space<vmem>>) attributes {dimension_semantics = [#tpu.dimension_semantics<parallel>], iteration_bounds = array<i64: 2>, scalar_prefetch = 0 : i64, scratch_operands = 0 : i64, tpu.core_type = #tpu.core_type<tc>, window_params = [{transform_indices = @transform_0, window_bounds = array<i64: 64, 32>}, {pipeline_mode = #tpu.pipeline_mode<synchronous>, transform_indices = @transform_1, window_bounds = array<i64: 32, 128>}, {pipeline_mode = #tpu.pipeline_mode<synchronous>, transform_indices = @transform_2, window_bounds = array<i64: 3, 384, 128>}, {pipeline_mode = #tpu.pipeline_mode<synchronous>, transform_indices = @transform_3, window_bounds = array<i64: 128, 32>}, {pipeline_mode = #tpu.pipeline_mode<synchronous>, transform_indices = @transform_4, window_bounds = array<i64: 1, 128>}, {pipeline_mode = #tpu.pipeline_mode<synchronous>, transform_indices = @transform_5, window_bounds = array<i64: 1, 128>}, {pipeline_mode = #tpu.pipeline_mode<synchronous>, transform_indices = @transform_6, window_bounds = array<i64: 1, 32>}, {transform_indices = @transform_7, window_bounds = array<i64: 64, 32>}]} {
    %c0 = arith.constant 0 : index
    %c0_0 = arith.constant 0 : index
    %0 = vector.load %arg1[%c0, %c0_0] : memref<64x32xbf16, #tpu.memory_space<vmem>>, vector<64x32xbf16>
    %c0_1 = arith.constant 0 : index
    %c0_2 = arith.constant 0 : index
    %1 = vector.load %arg2[%c0_1, %c0_2] : memref<32x128xbf16, #tpu.memory_space<vmem>>, vector<32x128xbf16>
    %cst = arith.constant dense<0.000000e+00> : vector<64x128xf32>
    %2 = tpu.matmul %0, %1, %cst {dimension_numbers = #tpu.dot_dimension_numbers<[1], [0], [0], [1], [0, 0, 1, 1], [], []>} : vector<64x32xbf16>, vector<32x128xbf16>, vector<64x128xf32> -> vector<64x128xf32>
    %c0_3 = arith.constant 0 : index
    %c0_4 = arith.constant 0 : index
    %3 = vector.load %arg5[%c0_3, %c0_4] : memref<1x128xf32, #tpu.memory_space<vmem>>, vector<1x128xf32>
    %4 = vector.broadcast %3 : vector<1x128xf32> to vector<64x128xf32>
    %5 = arith.addf %2, %4 : vector<64x128xf32>
    %cst_5 = arith.constant 0.000000e+00 : f32
    %6 = vector.broadcast %cst_5 : f32 to vector<64x128xf32>
    %7 = arith.maximumf %5, %6 : vector<64x128xf32>
    %8 = vector.shape_cast %7 : vector<64x128xf32> to vector<1x8x8x128xf32>
    %cst_6 = arith.constant 0.000000e+00 : f32
    %9 = vector.broadcast %cst_6 : f32 to vector<1x8x1x128xf32>
    %cst_7 = arith.constant 0.000000e+00 : f32
    %10 = vector.broadcast %cst_7 : f32 to vector<1x1x10x128xf32>
    %11 = tpu.concatenate %9, %8, %9 in 2 : vector<1x8x1x128xf32>, vector<1x8x8x128xf32>, vector<1x8x1x128xf32> -> vector<1x8x10x128xf32>
    %12 = tpu.concatenate %10, %11, %10 in 1 : vector<1x1x10x128xf32>, vector<1x8x10x128xf32>, vector<1x1x10x128xf32> -> vector<1x10x10x128xf32>
    %13 = vector.extract_strided_slice %12 {offsets = [0, 0, 0, 0], sizes = [1, 8, 10, 128], strides = [1, 1, 1, 1]} : vector<1x10x10x128xf32> to vector<1x8x10x128xf32>
    %14 = vector.extract_strided_slice %13 {offsets = [0, 0, 0, 0], sizes = [1, 8, 8, 128], strides = [1, 1, 1, 1]} : vector<1x8x10x128xf32> to vector<1x8x8x128xf32>
    %15 = vector.extract_strided_slice %13 {offsets = [0, 0, 1, 0], sizes = [1, 8, 8, 128], strides = [1, 1, 1, 1]} : vector<1x8x10x128xf32> to vector<1x8x8x128xf32>
    %16 = vector.extract_strided_slice %13 {offsets = [0, 0, 2, 0], sizes = [1, 8, 8, 128], strides = [1, 1, 1, 1]} : vector<1x8x10x128xf32> to vector<1x8x8x128xf32>
    %17 = tpu.concatenate %14, %15, %16 in 3 : vector<1x8x8x128xf32>, vector<1x8x8x128xf32>, vector<1x8x8x128xf32> -> vector<1x8x8x384xf32>
    %18 = vector.shape_cast %17 : vector<1x8x8x384xf32> to vector<64x384xf32>
    %19 = arith.truncf %18 : vector<64x384xf32> to vector<64x384xbf16>
    %c0_8 = arith.constant 0 : index
    %c0_9 = arith.constant 0 : index
    %c0_10 = arith.constant 0 : index
    %20 = vector.load %arg3[%c0_8, %c0_9, %c0_10] : memref<3x384x128xbf16, #tpu.memory_space<vmem>>, vector<1x384x128xbf16>
    %21 = vector.shape_cast %20 : vector<1x384x128xbf16> to vector<384x128xbf16>
    %cst_11 = arith.constant dense<0.000000e+00> : vector<64x128xf32>
    %22 = tpu.matmul %19, %21, %cst_11 {dimension_numbers = #tpu.dot_dimension_numbers<[1], [0], [0], [1], [0, 0, 1, 1], [], []>} : vector<64x384xbf16>, vector<384x128xbf16>, vector<64x128xf32> -> vector<64x128xf32>
    %23 = vector.extract_strided_slice %12 {offsets = [0, 1, 0, 0], sizes = [1, 8, 10, 128], strides = [1, 1, 1, 1]} : vector<1x10x10x128xf32> to vector<1x8x10x128xf32>
    %24 = vector.extract_strided_slice %23 {offsets = [0, 0, 0, 0], sizes = [1, 8, 8, 128], strides = [1, 1, 1, 1]} : vector<1x8x10x128xf32> to vector<1x8x8x128xf32>
    %25 = vector.extract_strided_slice %23 {offsets = [0, 0, 1, 0], sizes = [1, 8, 8, 128], strides = [1, 1, 1, 1]} : vector<1x8x10x128xf32> to vector<1x8x8x128xf32>
    %26 = vector.extract_strided_slice %23 {offsets = [0, 0, 2, 0], sizes = [1, 8, 8, 128], strides = [1, 1, 1, 1]} : vector<1x8x10x128xf32> to vector<1x8x8x128xf32>
    %27 = tpu.concatenate %24, %25, %26 in 3 : vector<1x8x8x128xf32>, vector<1x8x8x128xf32>, vector<1x8x8x128xf32> -> vector<1x8x8x384xf32>
    %28 = vector.shape_cast %27 : vector<1x8x8x384xf32> to vector<64x384xf32>
    %29 = arith.truncf %28 : vector<64x384xf32> to vector<64x384xbf16>
    %c1 = arith.constant 1 : index
    %c0_12 = arith.constant 0 : index
    %c0_13 = arith.constant 0 : index
    %30 = vector.load %arg3[%c1, %c0_12, %c0_13] : memref<3x384x128xbf16, #tpu.memory_space<vmem>>, vector<1x384x128xbf16>
    %31 = vector.shape_cast %30 : vector<1x384x128xbf16> to vector<384x128xbf16>
    %cst_14 = arith.constant dense<0.000000e+00> : vector<64x128xf32>
    %32 = tpu.matmul %29, %31, %cst_14 {dimension_numbers = #tpu.dot_dimension_numbers<[1], [0], [0], [1], [0, 0, 1, 1], [], []>} : vector<64x384xbf16>, vector<384x128xbf16>, vector<64x128xf32> -> vector<64x128xf32>
    %33 = arith.addf %22, %32 : vector<64x128xf32>
    %34 = vector.extract_strided_slice %12 {offsets = [0, 2, 0, 0], sizes = [1, 8, 10, 128], strides = [1, 1, 1, 1]} : vector<1x10x10x128xf32> to vector<1x8x10x128xf32>
    %35 = vector.extract_strided_slice %34 {offsets = [0, 0, 0, 0], sizes = [1, 8, 8, 128], strides = [1, 1, 1, 1]} : vector<1x8x10x128xf32> to vector<1x8x8x128xf32>
    %36 = vector.extract_strided_slice %34 {offsets = [0, 0, 1, 0], sizes = [1, 8, 8, 128], strides = [1, 1, 1, 1]} : vector<1x8x10x128xf32> to vector<1x8x8x128xf32>
    %37 = vector.extract_strided_slice %34 {offsets = [0, 0, 2, 0], sizes = [1, 8, 8, 128], strides = [1, 1, 1, 1]} : vector<1x8x10x128xf32> to vector<1x8x8x128xf32>
    %38 = tpu.concatenate %35, %36, %37 in 3 : vector<1x8x8x128xf32>, vector<1x8x8x128xf32>, vector<1x8x8x128xf32> -> vector<1x8x8x384xf32>
    %39 = vector.shape_cast %38 : vector<1x8x8x384xf32> to vector<64x384xf32>
    %40 = arith.truncf %39 : vector<64x384xf32> to vector<64x384xbf16>
    %c2 = arith.constant 2 : index
    %c0_15 = arith.constant 0 : index
    %c0_16 = arith.constant 0 : index
    %41 = vector.load %arg3[%c2, %c0_15, %c0_16] : memref<3x384x128xbf16, #tpu.memory_space<vmem>>, vector<1x384x128xbf16>
    %42 = vector.shape_cast %41 : vector<1x384x128xbf16> to vector<384x128xbf16>
    %cst_17 = arith.constant dense<0.000000e+00> : vector<64x128xf32>
    %43 = tpu.matmul %40, %42, %cst_17 {dimension_numbers = #tpu.dot_dimension_numbers<[1], [0], [0], [1], [0, 0, 1, 1], [], []>} : vector<64x384xbf16>, vector<384x128xbf16>, vector<64x128xf32> -> vector<64x128xf32>
    %44 = arith.addf %33, %43 : vector<64x128xf32>
    %c0_18 = arith.constant 0 : index
    %c0_19 = arith.constant 0 : index
    %45 = vector.load %arg6[%c0_18, %c0_19] : memref<1x128xf32, #tpu.memory_space<vmem>>, vector<1x128xf32>
    %46 = vector.broadcast %45 : vector<1x128xf32> to vector<64x128xf32>
    %47 = arith.addf %44, %46 : vector<64x128xf32>
    %cst_20 = arith.constant 0.000000e+00 : f32
    %48 = vector.broadcast %cst_20 : f32 to vector<64x128xf32>
    %49 = arith.maximumf %47, %48 : vector<64x128xf32>
    %50 = arith.truncf %49 : vector<64x128xf32> to vector<64x128xbf16>
    %c0_21 = arith.constant 0 : index
    %c0_22 = arith.constant 0 : index
    %51 = vector.load %arg4[%c0_21, %c0_22] : memref<128x32xbf16, #tpu.memory_space<vmem>>, vector<128x32xbf16>
    %cst_23 = arith.constant dense<0.000000e+00> : vector<64x32xf32>
    %52 = tpu.matmul %50, %51, %cst_23 {dimension_numbers = #tpu.dot_dimension_numbers<[1], [0], [0], [1], [0, 0, 1, 1], [], []>} : vector<64x128xbf16>, vector<128x32xbf16>, vector<64x32xf32> -> vector<64x32xf32>
    %c0_24 = arith.constant 0 : index
    %c0_25 = arith.constant 0 : index
    %53 = vector.load %arg7[%c0_24, %c0_25] : memref<1x32xf32, #tpu.memory_space<vmem>>, vector<1x32xf32>
    %54 = vector.broadcast %53 : vector<1x32xf32> to vector<64x32xf32>
    %55 = arith.addf %52, %54 : vector<64x32xf32>
    %56 = arith.extf %0 : vector<64x32xbf16> to vector<64x32xf32>
    %57 = arith.addf %55, %56 : vector<64x32xf32>
    %cst_26 = arith.constant 0.000000e+00 : f32
    %58 = vector.broadcast %cst_26 : f32 to vector<64x32xf32>
    %59 = arith.maximumf %57, %58 : vector<64x32xf32>
    %60 = arith.truncf %59 : vector<64x32xf32> to vector<64x32xbf16>
    %c0_27 = arith.constant 0 : index
    %c0_28 = arith.constant 0 : index
    %61 = vector.load %arg8[%c0_27, %c0_28] : memref<64x32xbf16, #tpu.memory_space<vmem>>, vector<64x32xbf16>
    tpu.vector_store %arg8[%c0_27, %c0_28], %60 {strides = array<i32>} : memref<64x32xbf16, #tpu.memory_space<vmem>>, vector<64x32xbf16>,
    return
  }
  func.func @transform_0(%arg0: i32) -> (i32, i32) {
    %c0_i32 = arith.constant 0 : i32
    %c0_i32_0 = arith.constant 0 : i32
    return %arg0, %c0_i32 : i32, i32
  }
  func.func @transform_1(%arg0: i32) -> (i32, i32) {
    %c0_i32 = arith.constant 0 : i32
    %c0_i32_0 = arith.constant 0 : i32
    %c0_i32_1 = arith.constant 0 : i32
    return %c0_i32, %c0_i32_0 : i32, i32
  }
  func.func @transform_2(%arg0: i32) -> (i32, i32, i32) {
    %c0_i32 = arith.constant 0 : i32
    %c0_i32_0 = arith.constant 0 : i32
    %c0_i32_1 = arith.constant 0 : i32
    %c0_i32_2 = arith.constant 0 : i32
    return %c0_i32, %c0_i32_0, %c0_i32_1 : i32, i32, i32
  }
  func.func @transform_3(%arg0: i32) -> (i32, i32) {
    %c0_i32 = arith.constant 0 : i32
    %c0_i32_0 = arith.constant 0 : i32
    %c0_i32_1 = arith.constant 0 : i32
    return %c0_i32, %c0_i32_0 : i32, i32
  }
  func.func @transform_4(%arg0: i32) -> (i32, i32) {
    %c0_i32 = arith.constant 0 : i32
    %c0_i32_0 = arith.constant 0 : i32
    %c0_i32_1 = arith.constant 0 : i32
    return %c0_i32, %c0_i32_0 : i32, i32
  }
  func.func @transform_5(%arg0: i32) -> (i32, i32) {
    %c0_i32 = arith.constant 0 : i32
    %c0_i32_0 = arith.constant 0 : i32
    %c0_i32_1 = arith.constant 0 : i32
    return %c0_i32, %c0_i32_0 : i32, i32
  }
  func.func @transform_6(%arg0: i32) -> (i32, i32) {
    %c0_i32 = arith.constant 0 : i32
    %c0_i32_0 = arith.constant 0 : i32
    %c0_i32_1 = arith.constant 0 : i32
    return %c0_i32, %c0_i32_0 : i32, i32
  }
  func.func @transform_7(%arg0: i32) -> (i32, i32) {
    %c0_i32 = arith.constant 0 : i32
    %c0_i32_0 = arith.constant 0 : i32
    return %arg0, %c0_i32 : i32, i32
  }
}

</mosaic_0001>

<llo_original>
// kernel: tpu_custom_call.1
$region0: #{tpu_custom_call.1}
  #allocation0 [shape = 'u32[]', space=smem, size = 0x4, offset = 0x4, fixed_abs, tag = 'smem constant byte address 0x4 - core index']
  #allocation1 [shape = 'u32[72,128]{1,0:T(1,128)}', space=vmem, size = 0x9000, scoped, tag = 'internal scratch']
  %s0 = inlined_call_operand.vmem [shape: bf16[128,32], index: 0, kind: input, shape index: {}]
  %s1 = inlined_call_operand.vmem [shape: bf16[32,128], index: 1, kind: input, shape index: {}]
  %s2 = inlined_call_operand.hbm [shape: bf16[3,384,128], index: 2, kind: input, shape index: {}]
  %s3 = inlined_call_operand.vmem [shape: bf16[128,32], index: 3, kind: input, shape index: {}]
  %s4 = inlined_call_operand.vmem [shape: f32[1,128], index: 4, kind: input, shape index: {}]
  %s5 = inlined_call_operand.vmem [shape: f32[1,128], index: 5, kind: input, shape index: {}]
  %s6 = inlined_call_operand.vmem [shape: f32[1,32], index: 6, kind: input, shape index: {}]
  %s7 = inlined_call_operand.vmem [shape: bf16[128,32], index: 7, kind: output, shape index: {}]
  %s8 = sld [smem:[#allocation0]]
  $region65: #{tpu_custom_call.1} parent=0
    _
  %s10 = ssub.s32 1, %s8
  %s11 = scalar_select 0, %s10, %s8
  $region1: #{tpu_custom_call.1} parent=0
    #allocation2 [shape = 'u8[294912]{0}', space=vmem, size = 0x48000, scoped, tag = 'input window, operand 2, single buffered']
    #allocation3 [shape = 's32[2]{0}', space=sflag, size = 0x8, scoped, tag = 'scoped memory for tpu_custom_call.1']
    %12 = vsyncpa [#allocation3], 0
    loop: start=0, step=1, limit=4
    $region2: #{tpu_custom_call.1} parent=1 // loop_pre_header
      _
    $region3: #{tpu_custom_call.1} parent=1 // loop_header
      %s14 = sphi 0, %s18
      %p15 = scmp.ge.s32.totalorder %s14, 4
      %s24 = sphi 0, %s26
      %s27 = sphi 0, %s24
      %s28 = sphi 0, %s27
      %s44 = sphi 0, %s28
      %s48 = sphi 0, %s48
      %s50 = sphi 0, %s48
      %s51 = sphi 0, %s50
      %s65 = sphi 0, %s51
      %s69 = sphi 0, %s69
      %s71 = sphi 0, %s69
      %s72 = sphi 0, %s71
      %s86 = sphi 0, %s72
      %s90 = sphi 0, %s90
      %s92 = sphi 0, %s90
      %s93 = sphi 0, %s92
      %s107 = sphi 0, %s93
      %s111 = sphi 0, %s111
      %s113 = sphi 0, %s111
      %s114 = sphi 0, %s113
      %s128 = sphi 0, %s114
      %s132 = sphi 0, %s132
      %s134 = sphi 0, %s132
      %s135 = sphi 0, %s134
      %s149 = sphi 0, %s135
      %s153 = sphi 0, %s153
      %s155 = sphi 0, %s153
      %s156 = sphi 0, %s155
      %s170 = sphi 0, %s156
      %s176 = sphi 0, %s178
      %s179 = sphi 0, %s176
      %s180 = sphi 0, %s179
      %s196 = sphi 0, %s180
    $region4: #{tpu_custom_call.1} parent=1 // loop_header_branch
      %17 = sbr.rel (%p15) target = $region8
    $region5: #{tpu_custom_call.1} parent=1 // loop_body
      %s19 = ssub.s32 %s14, 1
      %s20 = ssub.s32 %s14, 2
      %s21 = sadd.s32 %s14, 1
      %s22 = ssub.s32 %s14, %s21
      %p23 = scmp.eq.s32.totalorder %s22, 0
      %s25 = sadd.s32 %s24, 1
      %s26 = scalar_select %p23, %s24, %s25
      %p29 = pneg %p23
      %p30 = scmp.eq.s32.totalorder %s14, 1
      %p31 = por %p29, %p30
      %p32 = scmp.ne.s32.totalorder %s24, %s27
      %p33 = scmp.eq.s32.totalorder %s14, 0
      %p34 = por %p32, %p33
      %p35 = scmp.ne.s32.totalorder %s24, %s27
      %p36 = scmp.eq.s32.totalorder %s19, 1
      %p37 = por %p35, %p36
      %p38 = scmp.ne.s32.totalorder %s27, %s28
      %p39 = scmp.eq.s32.totalorder %s19, 0
      %p40 = por %p38, %p39
      %p41 = scmp.ne.s32.totalorder %s27, %s28
      %p42 = scmp.eq.s32.totalorder %s20, 1
      %p43 = por %p41, %p42
      %p45 = scmp.ne.s32.totalorder %s28, %s44
      %p46 = scmp.eq.s32.totalorder %s20, 0
      %p47 = por %p45, %p46
      %s49 = sadd.s32 %s48, 1
      %p52 = scmp.eq.s32.totalorder %s14, 1
      %p53 = scmp.ne.s32.totalorder %s48, %s50
      %p54 = scmp.eq.s32.totalorder %s14, 0
      %p55 = por %p53, %p54
      %p56 = scmp.ne.s32.totalorder %s48, %s50
      %p57 = scmp.eq.s32.totalorder %s19, 1
      %p58 = por %p56, %p57
      %p59 = scmp.ne.s32.totalorder %s50, %s51
      %p60 = scmp.eq.s32.totalorder %s19, 0
      %p61 = por %p59, %p60
      %p62 = scmp.ne.s32.totalorder %s50, %s51
      %p63 = scmp.eq.s32.totalorder %s20, 1
      %p64 = por %p62, %p63
      %p66 = scmp.ne.s32.totalorder %s51, %s65
      %p67 = scmp.eq.s32.totalorder %s20, 0
      %p68 = por %p66, %p67
      %s70 = sadd.s32 %s69, 1
      %p73 = scmp.eq.s32.totalorder %s14, 1
      %p74 = scmp.ne.s32.totalorder %s69, %s71
      %p75 = scmp.eq.s32.totalorder %s14, 0
      %p76 = por %p74, %p75
      %p77 = scmp.ne.s32.totalorder %s69, %s71
      %p78 = scmp.eq.s32.totalorder %s19, 1
      %p79 = por %p77, %p78
      %p80 = scmp.ne.s32.totalorder %s71, %s72
      %p81 = scmp.eq.s32.totalorder %s19, 0
      %p82 = por %p80, %p81
      %p83 = scmp.ne.s32.totalorder %s71, %s72
      %p84 = scmp.eq.s32.totalorder %s20, 1
      %p85 = por %p83, %p84
      %p87 = scmp.ne.s32.totalorder %s72, %s86
      %p88 = scmp.eq.s32.totalorder %s20, 0
      %p89 = por %p87, %p88
      %s91 = sadd.s32 %s90, 1
      %p94 = scmp.eq.s32.totalorder %s14, 1
      %p95 = scmp.ne.s32.totalorder %s90, %s92
      %p96 = scmp.eq.s32.totalorder %s14, 0
      %p97 = por %p95, %p96
      %p98 = scmp.ne.s32.totalorder %s90, %s92
      %p99 = scmp.eq.s32.totalorder %s19, 1
      %p100 = por %p98, %p99
      %p101 = scmp.ne.s32.totalorder %s92, %s93
      %p102 = scmp.eq.s32.totalorder %s19, 0
      %p103 = por %p101, %p102
      %p104 = scmp.ne.s32.totalorder %s92, %s93
      %p105 = scmp.eq.s32.totalorder %s20, 1
      %p106 = por %p104, %p105
      %p108 = scmp.ne.s32.totalorder %s93, %s107
      %p109 = scmp.eq.s32.totalorder %s20, 0
      %p110 = por %p108, %p109
      %s112 = sadd.s32 %s111, 1
      %p115 = scmp.eq.s32.totalorder %s14, 1
      %p116 = scmp.ne.s32.totalorder %s111, %s113
      %p117 = scmp.eq.s32.totalorder %s14, 0
      %p118 = por %p116, %p117
      %p119 = scmp.ne.s32.totalorder %s111, %s113
      %p120 = scmp.eq.s32.totalorder %s19, 1
      %p121 = por %p119, %p120
      %p122 = scmp.ne.s32.totalorder %s113, %s114
      %p123 = scmp.eq.s32.totalorder %s19, 0
      %p124 = por %p122, %p123
      %p125 = scmp.ne.s32.totalorder %s113, %s114
      %p126 = scmp.eq.s32.totalorder %s20, 1
      %p127 = por %p125, %p126
      %p129 = scmp.ne.s32.totalorder %s114, %s128
      %p130 = scmp.eq.s32.totalorder %s20, 0
      %p131 = por %p129, %p130
      %s133 = sadd.s32 %s132, 1
      %p136 = scmp.eq.s32.totalorder %s14, 1
      %p137 = scmp.ne.s32.totalorder %s132, %s134
      %p138 = scmp.eq.s32.totalorder %s14, 0
      %p139 = por %p137, %p138
      %p140 = scmp.ne.s32.totalorder %s132, %s134
      %p141 = scmp.eq.s32.totalorder %s19, 1
      %p142 = por %p140, %p141
      %p143 = scmp.ne.s32.totalorder %s134, %s135
      %p144 = scmp.eq.s32.totalorder %s19, 0
      %p145 = por %p143, %p144
      %p146 = scmp.ne.s32.totalorder %s134, %s135
      %p147 = scmp.eq.s32.totalorder %s20, 1
      %p148 = por %p146, %p147
      %p150 = scmp.ne.s32.totalorder %s135, %s149
      %p151 = scmp.eq.s32.totalorder %s20, 0
      %p152 = por %p150, %p151
      %s154 = sadd.s32 %s153, 1
      %p157 = scmp.eq.s32.totalorder %s14, 1
      %p158 = scmp.ne.s32.totalorder %s153, %s155
      %p159 = scmp.eq.s32.totalorder %s14, 0
      %p160 = por %p158, %p159
      %p161 = scmp.ne.s32.totalorder %s153, %s155
      %p162 = scmp.eq.s32.totalorder %s19, 1
      %p163 = por %p161, %p162
      %p164 = scmp.ne.s32.totalorder %s155, %s156
      %p165 = scmp.eq.s32.totalorder %s19, 0
      %p166 = por %p164, %p165
      %p167 = scmp.ne.s32.totalorder %s155, %s156
      %p168 = scmp.eq.s32.totalorder %s20, 1
      %p169 = por %p167, %p168
      %p171 = scmp.ne.s32.totalorder %s156, %s170
      %p172 = scmp.eq.s32.totalorder %s20, 0
      %p173 = por %p171, %p172
      %s174 = ssub.s32 %s14, %s21
      %p175 = scmp.eq.s32.totalorder %s174, 0
      %s177 = sadd.s32 %s176, 1
      %s178 = scalar_select %p175, %s176, %s177
      %p181 = pneg %p175
      %p182 = scmp.eq.s32.totalorder %s14, 1
      %p183 = por %p181, %p182
      %p184 = scmp.ne.s32.totalorder %s176, %s179
      %p185 = scmp.eq.s32.totalorder %s14, 0
      %p186 = por %p184, %p185
      %p187 = scmp.ne.s32.totalorder %s176, %s179
      %p188 = scmp.eq.s32.totalorder %s19, 1
      %p189 = por %p187, %p188
      %p190 = scmp.ne.s32.totalorder %s179, %s180
      %p191 = scmp.eq.s32.totalorder %s19, 0
      %p192 = por %p190, %p191
      %p193 = scmp.ne.s32.totalorder %s179, %s180
      %p194 = scmp.eq.s32.totalorder %s20, 1
      %p195 = por %p193, %p194
      %p197 = scmp.ne.s32.totalorder %s180, %s196
      %p198 = scmp.eq.s32.totalorder %s20, 0
      %p199 = por %p197, %p198
      %p200 = scmp.le.s32.totalorder 1, %s14
      %p201 = scmp.lt.s32.totalorder %s14, 3
      %p202 = pnand %p200, %p201
      %p203 = pneg %p202
      // Predicated region
      $region9: #{tpu_custom_call.1} parent=5 // pred_check
        _
      $region10: #{tpu_custom_call.1} parent=5 // pred_check_branch
        %205 = sbr.rel (%p202) target = $region12
      $region11: #{tpu_custom_call.1} parent=5 // pred_region
        %s206 = ssub.s32 %s14, 1
        // Predicated region
        $region13: #{tpu_custom_call.1} parent=11 // pred_check
          %p207 = pneg %p61
        $region14: #{tpu_custom_call.1} parent=11 // pred_check_branch
          %209 = sbr.rel (%p207) target = $region16
        $region15: #{tpu_custom_call.1} parent=11 // pred_region
          _
        $region16: #{tpu_custom_call.1} parent=11 // pred_fallthru
          _
        // Predicated region
        $region17: #{tpu_custom_call.1} parent=11 // pred_check
          %p210 = pneg %p82
        $region18: #{tpu_custom_call.1} parent=11 // pred_check_branch
          %212 = sbr.rel (%p210) target = $region20
        $region19: #{tpu_custom_call.1} parent=11 // pred_region
          %214 = vsyncadd [#allocation3], 0
          %s215 = sshll.u32 %s2, 4
          %s216 = int_to_ptr.hbm [resolvable:$true] %s215
          %s217 = sshll.u32 [#allocation2], 4
          %s218 = int_to_ptr.vmem [resolvable:$true] %s217
          %223 = dma.hbm_to_vmem [thread:$0]  %s216, 9216, %s218, [#allocation3], 64, 64, 4
        $region20: #{tpu_custom_call.1} parent=11 // pred_fallthru
          _
        // Predicated region
        $region21: #{tpu_custom_call.1} parent=11 // pred_check
          %p224 = pneg %p103
        $region22: #{tpu_custom_call.1} parent=11 // pred_check_branch
          %226 = sbr.rel (%p224) target = $region24
        $region23: #{tpu_custom_call.1} parent=11 // pred_region
          _
        $region24: #{tpu_custom_call.1} parent=11 // pred_fallthru
          _
        // Predicated region
        $region25: #{tpu_custom_call.1} parent=11 // pred_check
          %p227 = pneg %p124
        $region26: #{tpu_custom_call.1} parent=11 // pred_check_branch
          %229 = sbr.rel (%p227) target = $region28
        $region27: #{tpu_custom_call.1} parent=11 // pred_region
          _
        $region28: #{tpu_custom_call.1} parent=11 // pred_fallthru
          _
        // Predicated region
        $region29: #{tpu_custom_call.1} parent=11 // pred_check
          %p230 = pneg %p145
        $region30: #{tpu_custom_call.1} parent=11 // pred_check_branch
          %232 = sbr.rel (%p230) target = $region32
        $region31: #{tpu_custom_call.1} parent=11 // pred_region
          _
        $region32: #{tpu_custom_call.1} parent=11 // pred_fallthru
          _
        // Predicated region
        $region33: #{tpu_custom_call.1} parent=11 // pred_check
          %p233 = pneg %p166
        $region34: #{tpu_custom_call.1} parent=11 // pred_check_branch
          %235 = sbr.rel (%p233) target = $region36
        $region35: #{tpu_custom_call.1} parent=11 // pred_region
          _
        $region36: #{tpu_custom_call.1} parent=11 // pred_fallthru
          _
      $region12: #{tpu_custom_call.1} parent=5 // pred_fallthru
        _
      %p236 = scmp.lt.s32.totalorder %s14, 2
      // Predicated region
      $region37: #{tpu_custom_call.1} parent=5 // pred_check
        %p237 = pneg %p236
      $region38: #{tpu_custom_call.1} parent=5 // pred_check_branch
        %239 = sbr.rel (%p237) target = $region40
      $region39: #{tpu_custom_call.1} parent=5 // pred_region
        // Predicated region
        $region41: #{tpu_custom_call.1} parent=39 // pred_check
          %p240 = pneg %p34
        $region42: #{tpu_custom_call.1} parent=39 // pred_check_branch
          %242 = sbr.rel (%p240) target = $region44
        $region43: #{tpu_custom_call.1} parent=39 // pred_region
          %s243 = smul.u32 8, %s14
          %p244 = scmp.lt.s32.totalorder %s243, 15
          %s245 = scalar_select %p244, %s243, 15
          %s246 = smul.addr %s245, 4
          %s247 = scalar_lea.vmem %s0, %s246
          %s248 = smul.u32 8, %s14
        $region44: #{tpu_custom_call.1} parent=39 // pred_fallthru
          _
      $region40: #{tpu_custom_call.1} parent=5 // pred_fallthru
        _
      %p249 = scmp.le.s32.totalorder 1, %s14
      %p250 = scmp.lt.s32.totalorder %s14, 3
      %p251 = pnand %p249, %p250
      %p252 = pneg %p251
      // Predicated region
      $region45: #{tpu_custom_call.1} parent=5 // pred_check
        _
      $region46: #{tpu_custom_call.1} parent=5 // pred_check_branch
        %254 = sbr.rel (%p251) target = $region48
      $region47: #{tpu_custom_call.1} parent=5 // pred_region
        %s255 = ssub.s32 %s14, 1
        // Predicated region
        $region49: #{tpu_custom_call.1} parent=47 // pred_check
          %p256 = pneg %p82
        $region50: #{tpu_custom_call.1} parent=47 // pred_check_branch
          %258 = sbr.rel (%p256) target = $region52
        $region51: #{tpu_custom_call.1} parent=47 // pred_region
          %260 = dma.done [#allocation3], 9216
        $region52: #{tpu_custom_call.1} parent=47 // pred_fallthru
          _
        %s261 = smul.u32 8, %s19
        %p262 = scmp.lt.s32.totalorder %s261, 15
        %s263 = scalar_select %p262, %s261, 15
        %s264 = smul.addr %s263, 4
        %s265 = scalar_lea.vmem %s0, %s264
        %p266 = pneg %p40
        %p267 = pneg %p37
        %p268 = pneg %p61
        %p269 = pneg %p58
        %p270 = pneg %p82
        %p271 = pneg %p79
        %p272 = pneg %p103
        %p273 = pneg %p100
        %p274 = pneg %p124
        %p275 = pneg %p121
        %p276 = pneg %p145
        %p277 = pneg %p142
        %p278 = pneg %p166
        %p279 = pneg %p163
        %p280 = pneg %p192
        %p281 = pneg %p189
        %s282 = smul.u32 8, %s19
        %p283 = scmp.lt.s32.totalorder %s282, 15
        %s284 = scalar_select %p283, %s282, 15
        %s285 = smul.addr %s284, 4
        %s286 = scalar_lea.vmem %s7, %s285
        %s287 = smul.u32 8, %s19
        %p288 = scmp.lt.s32.totalorder %s287, 15
        %s289 = scalar_select %p288, %s287, 15
        %s290 = smul.addr %s289, 4
        %s291 = scalar_lea.vmem %s0, %s290
        %s292 = smul.u32 8, %s19
        %s293 = smul.u32 8, %s19
        %p294 = scmp.lt.s32.totalorder %s293, 15
        %s295 = scalar_select %p294, %s293, 15
        %s296 = smul.addr %s295, 4
        %s297 = scalar_lea.vmem %s7, %s296
        %s298 = smul.u32 8, %s19
        %v300 = vld [vmem:[%s291] sm:$0xf]
        %v301 = vld [vmem:[%s291 + $0x4] sm:$0xf]
        %v302 = vld [vmem:[%s291 + $0x8] sm:$0xf]
        %v303 = vld [vmem:[%s291 + $0xc] sm:$0xf]
        %v304 = vld [vmem:[%s291 + $0x10] sm:$0xf]
        %v305 = vld [vmem:[%s291 + $0x14] sm:$0xf]
        %v306 = vld [vmem:[%s291 + $0x18] sm:$0xf]
        %v307 = vld [vmem:[%s291 + $0x1c] sm:$0xf]
        %v308 = vld [vmem:[%s1] sm:$0xf]
        %v309 = vld [vmem:[%s1 + $0x4] sm:$0xf]
        %v310 = vld [vmem:[%s1 + $0x8] sm:$0xf]
        %v311 = vld [vmem:[%s1 + $0xc] sm:$0xf]
        %v312 = vld [vmem:[%s4] sm:$0x1]
        %v314 = vperm.slane %v312, 0
        %v324 = vunpack.c.l.b16 %v300
        %v325 = vunpack.c.l.b16 %v301
        %v326 = vunpack.c.l.b16 %v302
        %v327 = vunpack.c.l.b16 %v303
        %v328 = vunpack.c.l.b16 %v304
        %v329 = vunpack.c.l.b16 %v305
        %v330 = vunpack.c.l.b16 %v306
        %v331 = vunpack.c.l.b16 %v307
        %v332 = vpack.c.b16 %v325, %v324
        %v333 = vpack.c.b16 %v327, %v326
        %v334 = vpack.c.b16 %v329, %v328
        %v335 = vpack.c.b16 %v331, %v330
        %v340 = vunpack.c.l.b16 %v308
        %v341 = vunpack.c.l.b16 %v309
        %v342 = vunpack.c.l.b16 %v310
        %v343 = vunpack.c.l.b16 %v311
        %v344 = vpack.c.b16 %v341, %v340
        %v345 = vpack.c.b16 %v343, %v342
        %vm348 = vcmask 261120
        %v350 = vsel %vm348, %v332, 0
        %v353 = vsel %vm348, %v333, 0
        %v356 = vsel %vm348, %v334, 0
        %v359 = vsel %vm348, %v335, 0
        %361 = vmatpush.bf16.msra.mxu0 0
        %362 = vmatpush.bf16.msra.mxu0 0
        %363 = vmatpush.bf16.msra.mxu0 0
        %364 = vmatpush.bf16.msra.mxu0 0
        %365 = vmatpush.bf16.msra.mxu0 0
        %366 = vmatpush.bf16.msra.mxu0 0
        %367 = vmatpush.bf16.msra.mxu0 %v345
        %368 = vmatpush.bf16.msra.mxu0 %v344
        %369 = vmatmul.bf16.gmra.mxu0 %v350
        %v370 = vpop.f32.mrf.mxu0
        %v371 = vadd.f32 %v314, %v370
        %v372 = vpop.f32.mrf.mxu0
        %v373 = vadd.f32 %v314, %v372
        %374 = vmatmul.bf16.gmra.mxu0 %v353
        %v375 = vpop.f32.mrf.mxu0
        %v376 = vadd.f32 %v314, %v375
        %v377 = vpop.f32.mrf.mxu0
        %v378 = vadd.f32 %v314, %v377
        %379 = vmatmul.bf16.gmra.mxu0 %v356
        %v380 = vpop.f32.mrf.mxu0
        %v381 = vadd.f32 %v314, %v380
        %v382 = vpop.f32.mrf.mxu0
        %v383 = vadd.f32 %v314, %v382
        %384 = vmatmul.bf16.gmra.mxu0 %v359
        %v385 = vpop.f32.mrf.mxu0
        %v386 = vadd.f32 %v314, %v385
        %v387 = vpop.f32.mrf.mxu0
        %v388 = vadd.f32 %v314, %v387
        %389 = vdwg.mxu0
        %v390 = vmax.f32 %v371, 0.0
        %v391 = vmax.f32 %v373, 0.0
        %v392 = vmax.f32 %v376, 0.0
        %v393 = vmax.f32 %v378, 0.0
        %v394 = vmax.f32 %v381, 0.0
        %v395 = vmax.f32 %v383, 0.0
        %v396 = vmax.f32 %v386, 0.0
        %v397 = vmax.f32 %v388, 0.0
        %v406 = vrot.slane %v390, 7
        %v407 = vrot.slane %v391, 7
        %v408 = vrot.slane %v392, 7
        %v409 = vrot.slane %v393, 7
        %v410 = vrot.slane %v394, 7
        %v411 = vrot.slane %v395, 7
        %v412 = vrot.slane %v396, 7
        %v413 = vrot.slane %v397, 7
        %vm422 = vcmask 1040384
        %v423 = vsel %vm422, 0.0, %v406
        %v424 = vsel %vm422, 0.0, %v407
        %v425 = vsel %vm422, 0.0, %v408
        %v426 = vsel %vm422, 0.0, %v409
        %v427 = vsel %vm422, 0.0, %v410
        %v428 = vsel %vm422, 0.0, %v411
        %v429 = vsel %vm422, 0.0, %v412
        %v430 = vsel %vm422, 0.0, %v413
        %v431 = vsel %vm422, %v406, 0.0
        %v432 = vsel %vm422, %v407, 0.0
        %v433 = vsel %vm422, %v408, 0.0
        %v434 = vsel %vm422, %v409, 0.0
        %v435 = vsel %vm422, %v410, 0.0
        %v436 = vsel %vm422, %v411, 0.0
        %v437 = vsel %vm422, %v412, 0.0
        %v438 = vsel %vm422, %v413, 0.0
        %vm454 = vcmask 1046528
        %v455 = vrot.slane 0.0, 1
        %v456 = vsel %vm454, %v455, %v455
        %v457 = vrot.slane %v423, 1
        %v458 = vrot.slane %v431, 1
        %v459 = vsel %vm454, %v457, %v458
        %v460 = vrot.slane %v424, 1
        %v461 = vrot.slane %v432, 1
        %v462 = vsel %vm454, %v460, %v461
        %v463 = vrot.slane %v425, 1
        %v464 = vrot.slane %v433, 1
        %v465 = vsel %vm454, %v463, %v464
        %v466 = vrot.slane %v426, 1
        %v467 = vrot.slane %v434, 1
        %v468 = vsel %vm454, %v466, %v467
        %v469 = vrot.slane %v427, 1
        %v470 = vrot.slane %v435, 1
        %v471 = vsel %vm454, %v469, %v470
        %v472 = vrot.slane %v428, 1
        %v473 = vrot.slane %v436, 1
        %v474 = vsel %vm454, %v472, %v473
        %v475 = vrot.slane %v429, 1
        %v476 = vrot.slane %v437, 1
        %v477 = vsel %vm454, %v475, %v476
        %vm486 = vcmask 1045504
        %v487 = vrot.slane 0.0, 2
        %v488 = vsel %vm486, %v487, %v487
        %v489 = vrot.slane %v423, 2
        %v490 = vrot.slane %v431, 2
        %v491 = vsel %vm486, %v489, %v490
        %v492 = vrot.slane %v424, 2
        %v493 = vrot.slane %v432, 2
        %v494 = vsel %vm486, %v492, %v493
        %v495 = vrot.slane %v425, 2
        %v496 = vrot.slane %v433, 2
        %v497 = vsel %vm486, %v495, %v496
        %v498 = vrot.slane %v426, 2
        %v499 = vrot.slane %v434, 2
        %v500 = vsel %vm486, %v498, %v499
        %v501 = vrot.slane %v427, 2
        %v502 = vrot.slane %v435, 2
        %v503 = vsel %vm486, %v501, %v502
        %v504 = vrot.slane %v428, 2
        %v505 = vrot.slane %v436, 2
        %v506 = vsel %vm486, %v504, %v505
        %v507 = vrot.slane %v429, 2
        %v508 = vrot.slane %v437, 2
        %v509 = vsel %vm486, %v507, %v508
        %v518 = vpack.c.bf16 %v423, 0.0
        %v519 = vpack.c.bf16 %v459, %v456
        %v520 = vpack.c.bf16 %v491, %v488
        %v521 = vpack.c.bf16 %v425, %v424
        %v522 = vpack.c.bf16 %v465, %v462
        %v523 = vpack.c.bf16 %v497, %v494
        %v524 = vpack.c.bf16 %v427, %v426
        %v525 = vpack.c.bf16 %v471, %v468
        %v526 = vpack.c.bf16 %v503, %v500
        %v527 = vpack.c.bf16 %v429, %v428
        %v528 = vpack.c.bf16 %v477, %v474
        %v529 = vpack.c.bf16 %v509, %v506
        %v530 = vld [vmem:[#allocation2] sm:$0xf]
        %v531 = vld [vmem:[#allocation2 + $0x4] sm:$0xf]
        %v532 = vld [vmem:[#allocation2 + $0x8] sm:$0xf]
        %v533 = vld [vmem:[#allocation2 + $0xc] sm:$0xf]
        %v534 = vld [vmem:[#allocation2 + $0x10] sm:$0xf]
        %v535 = vld [vmem:[#allocation2 + $0x14] sm:$0xf]
        %v536 = vld [vmem:[#allocation2 + $0x18] sm:$0xf]
        %v537 = vld [vmem:[#allocation2 + $0x1c] sm:$0xf]
        %v538 = vld [vmem:[#allocation2 + $0x20] sm:$0xf]
        %v539 = vld [vmem:[#allocation2 + $0x24] sm:$0xf]
        %v540 = vld [vmem:[#allocation2 + $0x28] sm:$0xf]
        %v541 = vld [vmem:[#allocation2 + $0x2c] sm:$0xf]
        %v542 = vld [vmem:[#allocation2 + $0x30] sm:$0xf]
        %v543 = vld [vmem:[#allocation2 + $0x34] sm:$0xf]
        %v544 = vld [vmem:[#allocation2 + $0x38] sm:$0xf]
        %v545 = vld [vmem:[#allocation2 + $0x3c] sm:$0xf]
        %v546 = vld [vmem:[#allocation2 + $0x40] sm:$0xf]
        %v547 = vld [vmem:[#allocation2 + $0x44] sm:$0xf]
        %v548 = vld [vmem:[#allocation2 + $0x48] sm:$0xf]
        %v549 = vld [vmem:[#allocation2 + $0x4c] sm:$0xf]
        %v550 = vld [vmem:[#allocation2 + $0x50] sm:$0xf]
        %v551 = vld [vmem:[#allocation2 + $0x54] sm:$0xf]
        %v552 = vld [vmem:[#allocation2 + $0x58] sm:$0xf]
        %v553 = vld [vmem:[#allocation2 + $0x5c] sm:$0xf]
        %v554 = vld [vmem:[#allocation2 + $0x60] sm:$0xf]
        %v555 = vld [vmem:[#allocation2 + $0x64] sm:$0xf]
        %v556 = vld [vmem:[#allocation2 + $0x68] sm:$0xf]
        %v557 = vld [vmem:[#allocation2 + $0x6c] sm:$0xf]
        %v558 = vld [vmem:[#allocation2 + $0x70] sm:$0xf]
        %v559 = vld [vmem:[#allocation2 + $0x74] sm:$0xf]
        %v560 = vld [vmem:[#allocation2 + $0x78] sm:$0xf]
        %v561 = vld [vmem:[#allocation2 + $0x7c] sm:$0xf]
        %v562 = vld [vmem:[#allocation2 + $0x80] sm:$0xf]
        %v563 = vld [vmem:[#allocation2 + $0x84] sm:$0xf]
        %v564 = vld [vmem:[#allocation2 + $0x88] sm:$0xf]
        %v565 = vld [vmem:[#allocation2 + $0x8c] sm:$0xf]
        %v566 = vld [vmem:[#allocation2 + $0x90] sm:$0xf]
        %v567 = vld [vmem:[#allocation2 + $0x94] sm:$0xf]
        %v568 = vld [vmem:[#allocation2 + $0x98] sm:$0xf]
        %v569 = vld [vmem:[#allocation2 + $0x9c] sm:$0xf]
        %v570 = vld [vmem:[#allocation2 + $0xa0] sm:$0xf]
        %v571 = vld [vmem:[#allocation2 + $0xa4] sm:$0xf]
        %v572 = vld [vmem:[#allocation2 + $0xa8] sm:$0xf]
        %v573 = vld [vmem:[#allocation2 + $0xac] sm:$0xf]
        %v574 = vld [vmem:[#allocation2 + $0xb0] sm:$0xf]
        %v575 = vld [vmem:[#allocation2 + $0xb4] sm:$0xf]
        %v576 = vld [vmem:[#allocation2 + $0xb8] sm:$0xf]
        %v577 = vld [vmem:[#allocation2 + $0xbc] sm:$0xf]
        %v580 = vrot.slane %v430, 1
        %v581 = vrot.slane %v438, 1
        %v582 = vsel %vm454, %v580, %v581
        %v584 = vrot.slane %v430, 2
        %v585 = vrot.slane %v438, 2
        %v586 = vsel %vm486, %v584, %v585
        %v588 = vpack.c.bf16 %v424, %v423
        %v589 = vpack.c.bf16 %v462, %v459
        %v590 = vpack.c.bf16 %v494, %v491
        %v591 = vpack.c.bf16 %v426, %v425
        %v592 = vpack.c.bf16 %v468, %v465
        %v593 = vpack.c.bf16 %v500, %v497
        %v594 = vpack.c.bf16 %v428, %v427
        %v595 = vpack.c.bf16 %v474, %v471
        %v596 = vpack.c.bf16 %v506, %v503
        %v597 = vpack.c.bf16 %v430, %v429
        %v598 = vpack.c.bf16 %v582, %v477
        %v599 = vpack.c.bf16 %v586, %v509
        %s600 = scalar_lea.vmem [#allocation2], 192
        %v601 = vld [vmem:[%s600] sm:$0xf]
        %v602 = vld [vmem:[%s600 + $0x4] sm:$0xf]
        %v603 = vld [vmem:[%s600 + $0x8] sm:$0xf]
        %v604 = vld [vmem:[%s600 + $0xc] sm:$0xf]
        %v605 = vld [vmem:[%s600 + $0x10] sm:$0xf]
        %v606 = vld [vmem:[%s600 + $0x14] sm:$0xf]
        %v607 = vld [vmem:[%s600 + $0x18] sm:$0xf]
        %v608 = vld [vmem:[%s600 + $0x1c] sm:$0xf]
        %v609 = vld [vmem:[%s600 + $0x20] sm:$0xf]
        %v610 = vld [vmem:[%s600 + $0x24] sm:$0xf]
        %v611 = vld [vmem:[%s600 + $0x28] sm:$0xf]
        %v612 = vld [vmem:[%s600 + $0x2c] sm:$0xf]
        %v613 = vld [vmem:[%s600 + $0x30] sm:$0xf]
        %v614 = vld [vmem:[%s600 + $0x34] sm:$0xf]
        %v615 = vld [vmem:[%s600 + $0x38] sm:$0xf]
        %v616 = vld [vmem:[%s600 + $0x3c] sm:$0xf]
        %v617 = vld [vmem:[%s600 + $0x40] sm:$0xf]
        %v618 = vld [vmem:[%s600 + $0x44] sm:$0xf]
        %v619 = vld [vmem:[%s600 + $0x48] sm:$0xf]
        %v620 = vld [vmem:[%s600 + $0x4c] sm:$0xf]
        %v621 = vld [vmem:[%s600 + $0x50] sm:$0xf]
        %v622 = vld [vmem:[%s600 + $0x54] sm:$0xf]
        %v623 = vld [vmem:[%s600 + $0x58] sm:$0xf]
        %v624 = vld [vmem:[%s600 + $0x5c] sm:$0xf]
        %v625 = vld [vmem:[%s600 + $0x60] sm:$0xf]
        %v626 = vld [vmem:[%s600 + $0x64] sm:$0xf]
        %v627 = vld [vmem:[%s600 + $0x68] sm:$0xf]
        %v628 = vld [vmem:[%s600 + $0x6c] sm:$0xf]
        %v629 = vld [vmem:[%s600 + $0x70] sm:$0xf]
        %v630 = vld [vmem:[%s600 + $0x74] sm:$0xf]
        %v631 = vld [vmem:[%s600 + $0x78] sm:$0xf]
        %v632 = vld [vmem:[%s600 + $0x7c] sm:$0xf]
        %v633 = vld [vmem:[%s600 + $0x80] sm:$0xf]
        %v634 = vld [vmem:[%s600 + $0x84] sm:$0xf]
        %v635 = vld [vmem:[%s600 + $0x88] sm:$0xf]
        %v636 = vld [vmem:[%s600 + $0x8c] sm:$0xf]
        %v637 = vld [vmem:[%s600 + $0x90] sm:$0xf]
        %v638 = vld [vmem:[%s600 + $0x94] sm:$0xf]
        %v639 = vld [vmem:[%s600 + $0x98] sm:$0xf]
        %v640 = vld [vmem:[%s600 + $0x9c] sm:$0xf]
        %v641 = vld [vmem:[%s600 + $0xa0] sm:$0xf]
        %v642 = vld [vmem:[%s600 + $0xa4] sm:$0xf]
        %v643 = vld [vmem:[%s600 + $0xa8] sm:$0xf]
        %v644 = vld [vmem:[%s600 + $0xac] sm:$0xf]
        %v645 = vld [vmem:[%s600 + $0xb0] sm:$0xf]
        %v646 = vld [vmem:[%s600 + $0xb4] sm:$0xf]
        %v647 = vld [vmem:[%s600 + $0xb8] sm:$0xf]
        %v648 = vld [vmem:[%s600 + $0xbc] sm:$0xf]
        %v697 = vunpack.c.l.b16 %v601
        %v698 = vunpack.c.l.b16 %v602
        %v699 = vunpack.c.l.b16 %v603
        %v700 = vunpack.c.l.b16 %v604
        %v701 = vunpack.c.l.b16 %v605
        %v702 = vunpack.c.l.b16 %v606
        %v703 = vunpack.c.l.b16 %v607
        %v704 = vunpack.c.l.b16 %v608
        %v705 = vunpack.c.l.b16 %v609
        %v706 = vunpack.c.l.b16 %v610
        %v707 = vunpack.c.l.b16 %v611
        %v708 = vunpack.c.l.b16 %v612
        %v709 = vunpack.c.l.b16 %v613
        %v710 = vunpack.c.l.b16 %v614
        %v711 = vunpack.c.l.b16 %v615
        %v712 = vunpack.c.l.b16 %v616
        %v713 = vunpack.c.l.b16 %v617
        %v714 = vunpack.c.l.b16 %v618
        %v715 = vunpack.c.l.b16 %v619
        %v716 = vunpack.c.l.b16 %v620
        %v717 = vunpack.c.l.b16 %v621
        %v718 = vunpack.c.l.b16 %v622
        %v719 = vunpack.c.l.b16 %v623
        %v720 = vunpack.c.l.b16 %v624
        %v721 = vunpack.c.l.b16 %v625
        %v722 = vunpack.c.l.b16 %v626
        %v723 = vunpack.c.l.b16 %v627
        %v724 = vunpack.c.l.b16 %v628
        %v725 = vunpack.c.l.b16 %v629
        %v726 = vunpack.c.l.b16 %v630
        %v727 = vunpack.c.l.b16 %v631
        %v728 = vunpack.c.l.b16 %v632
        %v729 = vunpack.c.l.b16 %v633
        %v730 = vunpack.c.l.b16 %v634
        %v731 = vunpack.c.l.b16 %v635
        %v732 = vunpack.c.l.b16 %v636
        %v733 = vunpack.c.l.b16 %v637
        %v734 = vunpack.c.l.b16 %v638
        %v735 = vunpack.c.l.b16 %v639
        %v736 = vunpack.c.l.b16 %v640
        %v737 = vunpack.c.l.b16 %v641
        %v738 = vunpack.c.l.b16 %v642
        %v739 = vunpack.c.l.b16 %v643
        %v740 = vunpack.c.l.b16 %v644
        %v741 = vunpack.c.l.b16 %v645
        %v742 = vunpack.c.l.b16 %v646
        %v743 = vunpack.c.l.b16 %v647
        %v744 = vunpack.c.l.b16 %v648
        %v745 = vpack.c.b16 %v698, %v697
        %v746 = vpack.c.b16 %v700, %v699
        %v747 = vpack.c.b16 %v702, %v701
        %v748 = vpack.c.b16 %v704, %v703
        %v749 = vpack.c.b16 %v706, %v705
        %v750 = vpack.c.b16 %v708, %v707
        %v751 = vpack.c.b16 %v710, %v709
        %v752 = vpack.c.b16 %v712, %v711
        %v753 = vpack.c.b16 %v714, %v713
        %v754 = vpack.c.b16 %v716, %v715
        %v755 = vpack.c.b16 %v718, %v717
        %v756 = vpack.c.b16 %v720, %v719
        %v757 = vpack.c.b16 %v722, %v721
        %v758 = vpack.c.b16 %v724, %v723
        %v759 = vpack.c.b16 %v726, %v725
        %v760 = vpack.c.b16 %v728, %v727
        %v761 = vpack.c.b16 %v730, %v729
        %v762 = vpack.c.b16 %v732, %v731
        %v763 = vpack.c.b16 %v734, %v733
        %v764 = vpack.c.b16 %v736, %v735
        %v765 = vpack.c.b16 %v738, %v737
        %v766 = vpack.c.b16 %v740, %v739
        %v767 = vpack.c.b16 %v742, %v741
        %v768 = vpack.c.b16 %v744, %v743
        %793 = vmatpush.bf16.msra.mxu0 %v752
        %794 = vmatpush.bf16.msra.mxu0 %v751
        %795 = vmatpush.bf16.msra.mxu0 %v750
        %796 = vmatpush.bf16.msra.mxu0 %v749
        %797 = vmatpush.bf16.msra.mxu0 %v748
        %798 = vmatpush.bf16.msra.mxu0 %v747
        %799 = vmatpush.bf16.msra.mxu0 %v746
        %800 = vmatpush.bf16.msra.mxu0 %v745
        %801 = vmatmul.bf16.gmra.mxu0 %v588
        %v802 = vpop.f32.mrf.mxu0
        %v803 = vadd.f32 0.0, %v802
        %v804 = vpop.f32.mrf.mxu0
        %v805 = vadd.f32 0.0, %v804
        %806 = vmatmul.bf16.gmra.mxu0 %v591
        %v807 = vpop.f32.mrf.mxu0
        %v808 = vadd.f32 0.0, %v807
        %v809 = vpop.f32.mrf.mxu0
        %v810 = vadd.f32 0.0, %v809
        %811 = vmatmul.bf16.gmra.mxu0 %v594
        %v812 = vpop.f32.mrf.mxu0
        %v813 = vadd.f32 0.0, %v812
        %v814 = vpop.f32.mrf.mxu0
        %v815 = vadd.f32 0.0, %v814
        %816 = vmatmul.bf16.gmra.mxu0 %v597
        %v817 = vpop.f32.mrf.mxu0
        %v818 = vadd.f32 0.0, %v817
        %v819 = vpop.f32.mrf.mxu0
        %v820 = vadd.f32 0.0, %v819
        %821 = vdwg.mxu0
        %822 = vmatpush.bf16.msra.mxu0 %v760
        %823 = vmatpush.bf16.msra.mxu0 %v759
        %824 = vmatpush.bf16.msra.mxu0 %v758
        %825 = vmatpush.bf16.msra.mxu0 %v757
        %826 = vmatpush.bf16.msra.mxu0 %v756
        %827 = vmatpush.bf16.msra.mxu0 %v755
        %828 = vmatpush.bf16.msra.mxu0 %v754
        %829 = vmatpush.bf16.msra.mxu0 %v753
        %830 = vmatmul.bf16.gmra.mxu0 %v589
        %v831 = vpop.f32.mrf.mxu0
        %v832 = vadd.f32 %v803, %v831
        %v833 = vpop.f32.mrf.mxu0
        %v834 = vadd.f32 %v805, %v833
        %835 = vmatmul.bf16.gmra.mxu0 %v592
        %v836 = vpop.f32.mrf.mxu0
        %v837 = vadd.f32 %v808, %v836
        %v838 = vpop.f32.mrf.mxu0
        %v839 = vadd.f32 %v810, %v838
        %840 = vmatmul.bf16.gmra.mxu0 %v595
        %v841 = vpop.f32.mrf.mxu0
        %v842 = vadd.f32 %v813, %v841
        %v843 = vpop.f32.mrf.mxu0
        %v844 = vadd.f32 %v815, %v843
        %845 = vmatmul.bf16.gmra.mxu0 %v598
        %v846 = vpop.f32.mrf.mxu0
        %v847 = vadd.f32 %v818, %v846
        %v848 = vpop.f32.mrf.mxu0
        %v849 = vadd.f32 %v820, %v848
        %850 = vdwg.mxu0
        %851 = vmatpush.bf16.msra.mxu0 %v768
        %852 = vmatpush.bf16.msra.mxu0 %v767
        %853 = vmatpush.bf16.msra.mxu0 %v766
        %854 = vmatpush.bf16.msra.mxu0 %v765
        %855 = vmatpush.bf16.msra.mxu0 %v764
        %856 = vmatpush.bf16.msra.mxu0 %v763
        %857 = vmatpush.bf16.msra.mxu0 %v762
        %858 = vmatpush.bf16.msra.mxu0 %v761
        %859 = vmatmul.bf16.gmra.mxu0 %v590
        %v860 = vpop.f32.mrf.mxu0
        %v861 = vadd.f32 %v832, %v860
        %v862 = vpop.f32.mrf.mxu0
        %v863 = vadd.f32 %v834, %v862
        %864 = vmatmul.bf16.gmra.mxu0 %v593
        %v865 = vpop.f32.mrf.mxu0
        %v866 = vadd.f32 %v837, %v865
        %v867 = vpop.f32.mrf.mxu0
        %v868 = vadd.f32 %v839, %v867
        %869 = vmatmul.bf16.gmra.mxu0 %v596
        %v870 = vpop.f32.mrf.mxu0
        %v871 = vadd.f32 %v842, %v870
        %v872 = vpop.f32.mrf.mxu0
        %v873 = vadd.f32 %v844, %v872
        %874 = vmatmul.bf16.gmra.mxu0 %v599
        %v875 = vpop.f32.mrf.mxu0
        %v876 = vadd.f32 %v847, %v875
        %v877 = vpop.f32.mrf.mxu0
        %v878 = vadd.f32 %v849, %v877
        %879 = vdwg.mxu0
        %v928 = vunpack.c.l.b16 %v530
        %v929 = vunpack.c.l.b16 %v531
        %v930 = vunpack.c.l.b16 %v532
        %v931 = vunpack.c.l.b16 %v533
        %v932 = vunpack.c.l.b16 %v534
        %v933 = vunpack.c.l.b16 %v535
        %v934 = vunpack.c.l.b16 %v536
        %v935 = vunpack.c.l.b16 %v537
        %v936 = vunpack.c.l.b16 %v538
        %v937 = vunpack.c.l.b16 %v539
        %v938 = vunpack.c.l.b16 %v540
        %v939 = vunpack.c.l.b16 %v541
        %v940 = vunpack.c.l.b16 %v542
        %v941 = vunpack.c.l.b16 %v543
        %v942 = vunpack.c.l.b16 %v544
        %v943 = vunpack.c.l.b16 %v545
        %v944 = vunpack.c.l.b16 %v546
        %v945 = vunpack.c.l.b16 %v547
        %v946 = vunpack.c.l.b16 %v548
        %v947 = vunpack.c.l.b16 %v549
        %v948 = vunpack.c.l.b16 %v550
        %v949 = vunpack.c.l.b16 %v551
        %v950 = vunpack.c.l.b16 %v552
        %v951 = vunpack.c.l.b16 %v553
        %v952 = vunpack.c.l.b16 %v554
        %v953 = vunpack.c.l.b16 %v555
        %v954 = vunpack.c.l.b16 %v556
        %v955 = vunpack.c.l.b16 %v557
        %v956 = vunpack.c.l.b16 %v558
        %v957 = vunpack.c.l.b16 %v559
        %v958 = vunpack.c.l.b16 %v560
        %v959 = vunpack.c.l.b16 %v561
        %v960 = vunpack.c.l.b16 %v562
        %v961 = vunpack.c.l.b16 %v563
        %v962 = vunpack.c.l.b16 %v564
        %v963 = vunpack.c.l.b16 %v565
        %v964 = vunpack.c.l.b16 %v566
        %v965 = vunpack.c.l.b16 %v567
        %v966 = vunpack.c.l.b16 %v568
        %v967 = vunpack.c.l.b16 %v569
        %v968 = vunpack.c.l.b16 %v570
        %v969 = vunpack.c.l.b16 %v571
        %v970 = vunpack.c.l.b16 %v572
        %v971 = vunpack.c.l.b16 %v573
        %v972 = vunpack.c.l.b16 %v574
        %v973 = vunpack.c.l.b16 %v575
        %v974 = vunpack.c.l.b16 %v576
        %v975 = vunpack.c.l.b16 %v577
        %v976 = vpack.c.b16 %v929, %v928
        %v977 = vpack.c.b16 %v931, %v930
        %v978 = vpack.c.b16 %v933, %v932
        %v979 = vpack.c.b16 %v935, %v934
        %v980 = vpack.c.b16 %v937, %v936
        %v981 = vpack.c.b16 %v939, %v938
        %v982 = vpack.c.b16 %v941, %v940
        %v983 = vpack.c.b16 %v943, %v942
        %v984 = vpack.c.b16 %v945, %v944
        %v985 = vpack.c.b16 %v947, %v946
        %v986 = vpack.c.b16 %v949, %v948
        %v987 = vpack.c.b16 %v951, %v950
        %v988 = vpack.c.b16 %v953, %v952
        %v989 = vpack.c.b16 %v955, %v954
        %v990 = vpack.c.b16 %v957, %v956
        %v991 = vpack.c.b16 %v959, %v958
        %v992 = vpack.c.b16 %v961, %v960
        %v993 = vpack.c.b16 %v963, %v962
        %v994 = vpack.c.b16 %v965, %v964
        %v995 = vpack.c.b16 %v967, %v966
        %v996 = vpack.c.b16 %v969, %v968
        %v997 = vpack.c.b16 %v971, %v970
        %v998 = vpack.c.b16 %v973, %v972
        %v999 = vpack.c.b16 %v975, %v974
        %1024 = vmatpush.bf16.msra.mxu0 %v983
        %1025 = vmatpush.bf16.msra.mxu0 %v982
        %1026 = vmatpush.bf16.msra.mxu0 %v981
        %1027 = vmatpush.bf16.msra.mxu0 %v980
        %1028 = vmatpush.bf16.msra.mxu0 %v979
        %1029 = vmatpush.bf16.msra.mxu0 %v978
        %1030 = vmatpush.bf16.msra.mxu0 %v977
        %1031 = vmatpush.bf16.msra.mxu0 %v976
        %1032 = vmatmul.bf16.gmra.mxu0 %v518
        %v1033 = vpop.f32.mrf.mxu0
        %v1034 = vadd.f32 %v861, %v1033
        %v1035 = vpop.f32.mrf.mxu0
        %v1036 = vadd.f32 %v863, %v1035
        %1037 = vmatmul.bf16.gmra.mxu0 %v521
        %v1038 = vpop.f32.mrf.mxu0
        %v1039 = vadd.f32 %v866, %v1038
        %v1040 = vpop.f32.mrf.mxu0
        %v1041 = vadd.f32 %v868, %v1040
        %1042 = vmatmul.bf16.gmra.mxu0 %v524
        %v1043 = vpop.f32.mrf.mxu0
        %v1044 = vadd.f32 %v871, %v1043
        %v1045 = vpop.f32.mrf.mxu0
        %v1046 = vadd.f32 %v873, %v1045
        %1047 = vmatmul.bf16.gmra.mxu0 %v527
        %v1048 = vpop.f32.mrf.mxu0
        %v1049 = vadd.f32 %v876, %v1048
        %v1050 = vpop.f32.mrf.mxu0
        %v1051 = vadd.f32 %v878, %v1050
        %1052 = vdwg.mxu0
        %1053 = vmatpush.bf16.msra.mxu0 %v991
        %1054 = vmatpush.bf16.msra.mxu0 %v990
        %1055 = vmatpush.bf16.msra.mxu0 %v989
        %1056 = vmatpush.bf16.msra.mxu0 %v988
        %1057 = vmatpush.bf16.msra.mxu0 %v987
        %1058 = vmatpush.bf16.msra.mxu0 %v986
        %1059 = vmatpush.bf16.msra.mxu0 %v985
        %1060 = vmatpush.bf16.msra.mxu0 %v984
        %1061 = vmatmul.bf16.gmra.mxu0 %v519
        %v1062 = vpop.f32.mrf.mxu0
        %v1063 = vadd.f32 %v1034, %v1062
        %v1064 = vpop.f32.mrf.mxu0
        %v1065 = vadd.f32 %v1036, %v1064
        %1066 = vmatmul.bf16.gmra.mxu0 %v522
        %v1067 = vpop.f32.mrf.mxu0
        %v1068 = vadd.f32 %v1039, %v1067
        %v1069 = vpop.f32.mrf.mxu0
        %v1070 = vadd.f32 %v1041, %v1069
        %1071 = vmatmul.bf16.gmra.mxu0 %v525
        %v1072 = vpop.f32.mrf.mxu0
        %v1073 = vadd.f32 %v1044, %v1072
        %v1074 = vpop.f32.mrf.mxu0
        %v1075 = vadd.f32 %v1046, %v1074
        %1076 = vmatmul.bf16.gmra.mxu0 %v528
        %v1077 = vpop.f32.mrf.mxu0
        %v1078 = vadd.f32 %v1049, %v1077
        %v1079 = vpop.f32.mrf.mxu0
        %v1080 = vadd.f32 %v1051, %v1079
        %1081 = vdwg.mxu0
        %1082 = vmatpush.bf16.msra.mxu0 %v999
        %1083 = vmatpush.bf16.msra.mxu0 %v998
        %1084 = vmatpush.bf16.msra.mxu0 %v997
        %1085 = vmatpush.bf16.msra.mxu0 %v996
        %1086 = vmatpush.bf16.msra.mxu0 %v995
        %1087 = vmatpush.bf16.msra.mxu0 %v994
        %1088 = vmatpush.bf16.msra.mxu0 %v993
        %1089 = vmatpush.bf16.msra.mxu0 %v992
        %1090 = vmatmul.bf16.gmra.mxu0 %v520
        %v1091 = vpop.f32.mrf.mxu0
        %v1092 = vadd.f32 %v1063, %v1091
        %v1093 = vpop.f32.mrf.mxu0
        %v1094 = vadd.f32 %v1065, %v1093
        %1095 = vmatmul.bf16.gmra.mxu0 %v523
        %v1096 = vpop.f32.mrf.mxu0
        %v1097 = vadd.f32 %v1068, %v1096
        %v1098 = vpop.f32.mrf.mxu0
        %v1099 = vadd.f32 %v1070, %v1098
        %1100 = vmatmul.bf16.gmra.mxu0 %v526
        %v1101 = vpop.f32.mrf.mxu0
        %v1102 = vadd.f32 %v1073, %v1101
        %v1103 = vpop.f32.mrf.mxu0
        %v1104 = vadd.f32 %v1075, %v1103
        %1105 = vmatmul.bf16.gmra.mxu0 %v529
        %v1106 = vpop.f32.mrf.mxu0
        %v1107 = vadd.f32 %v1078, %v1106
        %v1108 = vpop.f32.mrf.mxu0
        %v1109 = vadd.f32 %v1080, %v1108
        %1110 = vdwg.mxu0
        %v1111 = vpack.c.bf16 0.0, %v430
        %v1112 = vpack.c.bf16 %v456, %v582
        %v1113 = vpack.c.bf16 %v488, %v586
        %s1114 = scalar_lea.vmem [#allocation2], 384
        %v1115 = vld [vmem:[%s1114] sm:$0xf]
        %v1116 = vld [vmem:[%s1114 + $0x4] sm:$0xf]
        %v1117 = vld [vmem:[%s1114 + $0x8] sm:$0xf]
        %v1118 = vld [vmem:[%s1114 + $0xc] sm:$0xf]
        %v1119 = vld [vmem:[%s1114 + $0x10] sm:$0xf]
        %v1120 = vld [vmem:[%s1114 + $0x14] sm:$0xf]
        %v1121 = vld [vmem:[%s1114 + $0x18] sm:$0xf]
        %v1122 = vld [vmem:[%s1114 + $0x1c] sm:$0xf]
        %v1123 = vld [vmem:[%s1114 + $0x20] sm:$0xf]
        %v1124 = vld [vmem:[%s1114 + $0x24] sm:$0xf]
        %v1125 = vld [vmem:[%s1114 + $0x28] sm:$0xf]
        %v1126 = vld [vmem:[%s1114 + $0x2c] sm:$0xf]
        %v1127 = vld [vmem:[%s1114 + $0x30] sm:$0xf]
        %v1128 = vld [vmem:[%s1114 + $0x34] sm:$0xf]
        %v1129 = vld [vmem:[%s1114 + $0x38] sm:$0xf]
        %v1130 = vld [vmem:[%s1114 + $0x3c] sm:$0xf]
        %v1131 = vld [vmem:[%s1114 + $0x40] sm:$0xf]
        %v1132 = vld [vmem:[%s1114 + $0x44] sm:$0xf]
        %v1133 = vld [vmem:[%s1114 + $0x48] sm:$0xf]
        %v1134 = vld [vmem:[%s1114 + $0x4c] sm:$0xf]
        %v1135 = vld [vmem:[%s1114 + $0x50] sm:$0xf]
        %v1136 = vld [vmem:[%s1114 + $0x54] sm:$0xf]
        %v1137 = vld [vmem:[%s1114 + $0x58] sm:$0xf]
        %v1138 = vld [vmem:[%s1114 + $0x5c] sm:$0xf]
        %v1139 = vld [vmem:[%s1114 + $0x60] sm:$0xf]
        %v1140 = vld [vmem:[%s1114 + $0x64] sm:$0xf]
        %v1141 = vld [vmem:[%s1114 + $0x68] sm:$0xf]
        %v1142 = vld [vmem:[%s1114 + $0x6c] sm:$0xf]
        %v1143 = vld [vmem:[%s1114 + $0x70] sm:$0xf]
        %v1144 = vld [vmem:[%s1114 + $0x74] sm:$0xf]
        %v1145 = vld [vmem:[%s1114 + $0x78] sm:$0xf]
        %v1146 = vld [vmem:[%s1114 + $0x7c] sm:$0xf]
        %v1147 = vld [vmem:[%s1114 + $0x80] sm:$0xf]
        %v1148 = vld [vmem:[%s1114 + $0x84] sm:$0xf]
        %v1149 = vld [vmem:[%s1114 + $0x88] sm:$0xf]
        %v1150 = vld [vmem:[%s1114 + $0x8c] sm:$0xf]
        %v1151 = vld [vmem:[%s1114 + $0x90] sm:$0xf]
        %v1152 = vld [vmem:[%s1114 + $0x94] sm:$0xf]
        %v1153 = vld [vmem:[%s1114 + $0x98] sm:$0xf]
        %v1154 = vld [vmem:[%s1114 + $0x9c] sm:$0xf]
        %v1155 = vld [vmem:[%s1114 + $0xa0] sm:$0xf]
        %v1156 = vld [vmem:[%s1114 + $0xa4] sm:$0xf]
        %v1157 = vld [vmem:[%s1114 + $0xa8] sm:$0xf]
        %v1158 = vld [vmem:[%s1114 + $0xac] sm:$0xf]
        %v1159 = vld [vmem:[%s1114 + $0xb0] sm:$0xf]
        %v1160 = vld [vmem:[%s1114 + $0xb4] sm:$0xf]
        %v1161 = vld [vmem:[%s1114 + $0xb8] sm:$0xf]
        %v1162 = vld [vmem:[%s1114 + $0xbc] sm:$0xf]
        %v1211 = vunpack.c.l.b16 %v1115
        %v1212 = vunpack.c.l.b16 %v1116
        %v1213 = vunpack.c.l.b16 %v1117
        %v1214 = vunpack.c.l.b16 %v1118
        %v1215 = vunpack.c.l.b16 %v1119
        %v1216 = vunpack.c.l.b16 %v1120
        %v1217 = vunpack.c.l.b16 %v1121
        %v1218 = vunpack.c.l.b16 %v1122
        %v1219 = vunpack.c.l.b16 %v1123
        %v1220 = vunpack.c.l.b16 %v1124
        %v1221 = vunpack.c.l.b16 %v1125
        %v1222 = vunpack.c.l.b16 %v1126
        %v1223 = vunpack.c.l.b16 %v1127
        %v1224 = vunpack.c.l.b16 %v1128
        %v1225 = vunpack.c.l.b16 %v1129
        %v1226 = vunpack.c.l.b16 %v1130
        %v1227 = vunpack.c.l.b16 %v1131
        %v1228 = vunpack.c.l.b16 %v1132
        %v1229 = vunpack.c.l.b16 %v1133
        %v1230 = vunpack.c.l.b16 %v1134
        %v1231 = vunpack.c.l.b16 %v1135
        %v1232 = vunpack.c.l.b16 %v1136
        %v1233 = vunpack.c.l.b16 %v1137
        %v1234 = vunpack.c.l.b16 %v1138
        %v1235 = vunpack.c.l.b16 %v1139
        %v1236 = vunpack.c.l.b16 %v1140
        %v1237 = vunpack.c.l.b16 %v1141
        %v1238 = vunpack.c.l.b16 %v1142
        %v1239 = vunpack.c.l.b16 %v1143
        %v1240 = vunpack.c.l.b16 %v1144
        %v1241 = vunpack.c.l.b16 %v1145
        %v1242 = vunpack.c.l.b16 %v1146
        %v1243 = vunpack.c.l.b16 %v1147
        %v1244 = vunpack.c.l.b16 %v1148
        %v1245 = vunpack.c.l.b16 %v1149
        %v1246 = vunpack.c.l.b16 %v1150
        %v1247 = vunpack.c.l.b16 %v1151
        %v1248 = vunpack.c.l.b16 %v1152
        %v1249 = vunpack.c.l.b16 %v1153
        %v1250 = vunpack.c.l.b16 %v1154
        %v1251 = vunpack.c.l.b16 %v1155
        %v1252 = vunpack.c.l.b16 %v1156
        %v1253 = vunpack.c.l.b16 %v1157
        %v1254 = vunpack.c.l.b16 %v1158
        %v1255 = vunpack.c.l.b16 %v1159
        %v1256 = vunpack.c.l.b16 %v1160
        %v1257 = vunpack.c.l.b16 %v1161
        %v1258 = vunpack.c.l.b16 %v1162
        %v1259 = vpack.c.b16 %v1212, %v1211
        %v1260 = vpack.c.b16 %v1214, %v1213
        %v1261 = vpack.c.b16 %v1216, %v1215
        %v1262 = vpack.c.b16 %v1218, %v1217
        %v1263 = vpack.c.b16 %v1220, %v1219
        %v1264 = vpack.c.b16 %v1222, %v1221
        %v1265 = vpack.c.b16 %v1224, %v1223
        %v1266 = vpack.c.b16 %v1226, %v1225
        %v1267 = vpack.c.b16 %v1228, %v1227
        %v1268 = vpack.c.b16 %v1230, %v1229
        %v1269 = vpack.c.b16 %v1232, %v1231
        %v1270 = vpack.c.b16 %v1234, %v1233
        %v1271 = vpack.c.b16 %v1236, %v1235
        %v1272 = vpack.c.b16 %v1238, %v1237
        %v1273 = vpack.c.b16 %v1240, %v1239
        %v1274 = vpack.c.b16 %v1242, %v1241
        %v1275 = vpack.c.b16 %v1244, %v1243
        %v1276 = vpack.c.b16 %v1246, %v1245
        %v1277 = vpack.c.b16 %v1248, %v1247
        %v1278 = vpack.c.b16 %v1250, %v1249
        %v1279 = vpack.c.b16 %v1252, %v1251
        %v1280 = vpack.c.b16 %v1254, %v1253
        %v1281 = vpack.c.b16 %v1256, %v1255
        %v1282 = vpack.c.b16 %v1258, %v1257
        %1307 = vmatpush.bf16.msra.mxu0 %v1266
        %1308 = vmatpush.bf16.msra.mxu0 %v1265
        %1309 = vmatpush.bf16.msra.mxu0 %v1264
        %1310 = vmatpush.bf16.msra.mxu0 %v1263
        %1311 = vmatpush.bf16.msra.mxu0 %v1262
        %1312 = vmatpush.bf16.msra.mxu0 %v1261
        %1313 = vmatpush.bf16.msra.mxu0 %v1260
        %1314 = vmatpush.bf16.msra.mxu0 %v1259
        %1315 = vmatmul.bf16.gmra.mxu0 %v521
        %v1316 = vpop.f32.mrf.mxu0
        %v1317 = vadd.f32 0.0, %v1316
        %v1318 = vpop.f32.mrf.mxu0
        %v1319 = vadd.f32 0.0, %v1318
        %1320 = vmatmul.bf16.gmra.mxu0 %v524
        %v1321 = vpop.f32.mrf.mxu0
        %v1322 = vadd.f32 0.0, %v1321
        %v1323 = vpop.f32.mrf.mxu0
        %v1324 = vadd.f32 0.0, %v1323
        %1325 = vmatmul.bf16.gmra.mxu0 %v527
        %v1326 = vpop.f32.mrf.mxu0
        %v1327 = vadd.f32 0.0, %v1326
        %v1328 = vpop.f32.mrf.mxu0
        %v1329 = vadd.f32 0.0, %v1328
        %1330 = vmatmul.bf16.gmra.mxu0 %v1111
        %v1331 = vpop.f32.mrf.mxu0
        %v1332 = vadd.f32 0.0, %v1331
        %v1333 = vpop.f32.mrf.mxu0
        %v1334 = vadd.f32 0.0, %v1333
        %1335 = vdwg.mxu0
        %1336 = vmatpush.bf16.msra.mxu0 %v1274
        %1337 = vmatpush.bf16.msra.mxu0 %v1273
        %1338 = vmatpush.bf16.msra.mxu0 %v1272
        %1339 = vmatpush.bf16.msra.mxu0 %v1271
        %1340 = vmatpush.bf16.msra.mxu0 %v1270
        %1341 = vmatpush.bf16.msra.mxu0 %v1269
        %1342 = vmatpush.bf16.msra.mxu0 %v1268
        %1343 = vmatpush.bf16.msra.mxu0 %v1267
        %1344 = vmatmul.bf16.gmra.mxu0 %v522
        %v1345 = vpop.f32.mrf.mxu0
        %v1346 = vadd.f32 %v1317, %v1345
        %v1347 = vpop.f32.mrf.mxu0
        %v1348 = vadd.f32 %v1319, %v1347
        %1349 = vmatmul.bf16.gmra.mxu0 %v525
        %v1350 = vpop.f32.mrf.mxu0
        %v1351 = vadd.f32 %v1322, %v1350
        %v1352 = vpop.f32.mrf.mxu0
        %v1353 = vadd.f32 %v1324, %v1352
        %1354 = vmatmul.bf16.gmra.mxu0 %v528
        %v1355 = vpop.f32.mrf.mxu0
        %v1356 = vadd.f32 %v1327, %v1355
        %v1357 = vpop.f32.mrf.mxu0
        %v1358 = vadd.f32 %v1329, %v1357
        %1359 = vmatmul.bf16.gmra.mxu0 %v1112
        %v1360 = vpop.f32.mrf.mxu0
        %v1361 = vadd.f32 %v1332, %v1360
        %v1362 = vpop.f32.mrf.mxu0
        %v1363 = vadd.f32 %v1334, %v1362
        %1364 = vdwg.mxu0
        %1365 = vmatpush.bf16.msra.mxu0 %v1282
        %1366 = vmatpush.bf16.msra.mxu0 %v1281
        %1367 = vmatpush.bf16.msra.mxu0 %v1280
        %1368 = vmatpush.bf16.msra.mxu0 %v1279
        %1369 = vmatpush.bf16.msra.mxu0 %v1278
        %1370 = vmatpush.bf16.msra.mxu0 %v1277
        %1371 = vmatpush.bf16.msra.mxu0 %v1276
        %1372 = vmatpush.bf16.msra.mxu0 %v1275
        %1373 = vmatmul.bf16.gmra.mxu0 %v523
        %v1374 = vpop.f32.mrf.mxu0
        %v1375 = vadd.f32 %v1346, %v1374
        %v1376 = vpop.f32.mrf.mxu0
        %v1377 = vadd.f32 %v1348, %v1376
        %1378 = vmatmul.bf16.gmra.mxu0 %v526
        %v1379 = vpop.f32.mrf.mxu0
        %v1380 = vadd.f32 %v1351, %v1379
        %v1381 = vpop.f32.mrf.mxu0
        %v1382 = vadd.f32 %v1353, %v1381
        %1383 = vmatmul.bf16.gmra.mxu0 %v529
        %v1384 = vpop.f32.mrf.mxu0
        %v1385 = vadd.f32 %v1356, %v1384
        %v1386 = vpop.f32.mrf.mxu0
        %v1387 = vadd.f32 %v1358, %v1386
        %1388 = vmatmul.bf16.gmra.mxu0 %v1113
        %v1389 = vpop.f32.mrf.mxu0
        %v1390 = vadd.f32 %v1361, %v1389
        %v1391 = vpop.f32.mrf.mxu0
        %v1392 = vadd.f32 %v1363, %v1391
        %1393 = vdwg.mxu0
        %v1394 = vadd.f32 %v1092, %v1375
        %v1395 = vadd.f32 %v1094, %v1377
        %v1396 = vadd.f32 %v1097, %v1380
        %v1397 = vadd.f32 %v1099, %v1382
        %v1398 = vadd.f32 %v1102, %v1385
        %v1399 = vadd.f32 %v1104, %v1387
        %v1400 = vadd.f32 %v1107, %v1390
        %v1401 = vadd.f32 %v1109, %v1392
        %v1402 = vld [vmem:[%s5] sm:$0x1]
        %v1404 = vperm.slane %v1402, 0
        %v1406 = vadd.f32 %v1394, %v1404
        %v1407 = vadd.f32 %v1395, %v1404
        %v1408 = vadd.f32 %v1396, %v1404
        %v1409 = vadd.f32 %v1397, %v1404
        %v1410 = vadd.f32 %v1398, %v1404
        %v1411 = vadd.f32 %v1399, %v1404
        %v1412 = vadd.f32 %v1400, %v1404
        %v1413 = vadd.f32 %v1401, %v1404
        %v1414 = vmax.f32 %v1406, 0.0
        %v1415 = vmax.f32 %v1407, 0.0
        %v1416 = vmax.f32 %v1408, 0.0
        %v1417 = vmax.f32 %v1409, 0.0
        %v1418 = vmax.f32 %v1410, 0.0
        %v1419 = vmax.f32 %v1411, 0.0
        %v1420 = vmax.f32 %v1412, 0.0
        %v1421 = vmax.f32 %v1413, 0.0
        %v1422 = vpack.c.bf16 %v1415, %v1414
        %v1423 = vpack.c.bf16 %v1417, %v1416
        %v1424 = vpack.c.bf16 %v1419, %v1418
        %v1425 = vpack.c.bf16 %v1421, %v1420
        %v1426 = vld [vmem:[%s3] sm:$0xf]
        %v1427 = vld [vmem:[%s3 + $0x4] sm:$0xf]
        %v1428 = vld [vmem:[%s3 + $0x8] sm:$0xf]
        %v1429 = vld [vmem:[%s3 + $0xc] sm:$0xf]
        %v1430 = vld [vmem:[%s3 + $0x10] sm:$0xf]
        %v1431 = vld [vmem:[%s3 + $0x14] sm:$0xf]
        %v1432 = vld [vmem:[%s3 + $0x18] sm:$0xf]
        %v1433 = vld [vmem:[%s3 + $0x1c] sm:$0xf]
        %v1434 = vld [vmem:[%s3 + $0x20] sm:$0xf]
        %v1435 = vld [vmem:[%s3 + $0x24] sm:$0xf]
        %v1436 = vld [vmem:[%s3 + $0x28] sm:$0xf]
        %v1437 = vld [vmem:[%s3 + $0x2c] sm:$0xf]
        %v1438 = vld [vmem:[%s3 + $0x30] sm:$0xf]
        %v1439 = vld [vmem:[%s3 + $0x34] sm:$0xf]
        %v1440 = vld [vmem:[%s3 + $0x38] sm:$0xf]
        %v1441 = vld [vmem:[%s3 + $0x3c] sm:$0xf]
        %v1442 = vld [vmem:[%s6] sm:$0x1]
        %v1444 = vperm.slane %v1442, 0
        %v1462 = vunpack.c.l.b16 %v1426
        %v1463 = vunpack.c.l.b16 %v1427
        %v1464 = vunpack.c.l.b16 %v1428
        %v1465 = vunpack.c.l.b16 %v1429
        %v1466 = vunpack.c.l.b16 %v1430
        %v1467 = vunpack.c.l.b16 %v1431
        %v1468 = vunpack.c.l.b16 %v1432
        %v1469 = vunpack.c.l.b16 %v1433
        %v1470 = vunpack.c.l.b16 %v1434
        %v1471 = vunpack.c.l.b16 %v1435
        %v1472 = vunpack.c.l.b16 %v1436
        %v1473 = vunpack.c.l.b16 %v1437
        %v1474 = vunpack.c.l.b16 %v1438
        %v1475 = vunpack.c.l.b16 %v1439
        %v1476 = vunpack.c.l.b16 %v1440
        %v1477 = vunpack.c.l.b16 %v1441
        %v1478 = vpack.c.b16 %v1463, %v1462
        %v1479 = vpack.c.b16 %v1465, %v1464
        %v1480 = vpack.c.b16 %v1467, %v1466
        %v1481 = vpack.c.b16 %v1469, %v1468
        %v1482 = vpack.c.b16 %v1471, %v1470
        %v1483 = vpack.c.b16 %v1473, %v1472
        %v1484 = vpack.c.b16 %v1475, %v1474
        %v1485 = vpack.c.b16 %v1477, %v1476
        %1494 = vmatpush.bf16.msra.mxu0 %v1485
        %1495 = vmatpush.bf16.msra.mxu0 %v1484
        %1496 = vmatpush.bf16.msra.mxu0 %v1483
        %1497 = vmatpush.bf16.msra.mxu0 %v1482
        %1498 = vmatpush.bf16.msra.mxu0 %v1481
        %1499 = vmatpush.bf16.msra.mxu0 %v1480
        %1500 = vmatpush.bf16.msra.mxu0 %v1479
        %1501 = vmatpush.bf16.msra.mxu0 %v1478
        %1502 = vmatmul.bf16.gmra.mxu0 %v1422
        %v1503 = vpop.f32.mrf.mxu0
        %v1504 = vadd.f32 %v1444, %v1503
        %v1505 = vpop.f32.mrf.mxu0
        %v1506 = vadd.f32 %v1444, %v1505
        %1507 = vmatmul.bf16.gmra.mxu0 %v1423
        %v1508 = vpop.f32.mrf.mxu0
        %v1509 = vadd.f32 %v1444, %v1508
        %v1510 = vpop.f32.mrf.mxu0
        %v1511 = vadd.f32 %v1444, %v1510
        %1512 = vmatmul.bf16.gmra.mxu0 %v1424
        %v1513 = vpop.f32.mrf.mxu0
        %v1514 = vadd.f32 %v1444, %v1513
        %v1515 = vpop.f32.mrf.mxu0
        %v1516 = vadd.f32 %v1444, %v1515
        %1517 = vmatmul.bf16.gmra.mxu0 %v1425
        %v1518 = vpop.f32.mrf.mxu0
        %v1519 = vadd.f32 %v1444, %v1518
        %v1520 = vpop.f32.mrf.mxu0
        %v1521 = vadd.f32 %v1444, %v1520
        %1522 = vdwg.mxu0
        %v1523 = vunpack.c.l.bf16 %v300
        %v1524 = vunpack.c.l.bf16 %v301
        %v1525 = vunpack.c.l.bf16 %v302
        %v1526 = vunpack.c.l.bf16 %v303
        %v1527 = vunpack.c.l.bf16 %v304
        %v1528 = vunpack.c.l.bf16 %v305
        %v1529 = vunpack.c.l.bf16 %v306
        %v1530 = vunpack.c.l.bf16 %v307
        %v1531 = vadd.f32 %v1504, %v1523
        %v1532 = vadd.f32 %v1506, %v1524
        %v1533 = vadd.f32 %v1509, %v1525
        %v1534 = vadd.f32 %v1511, %v1526
        %v1535 = vadd.f32 %v1514, %v1527
        %v1536 = vadd.f32 %v1516, %v1528
        %v1537 = vadd.f32 %v1519, %v1529
        %v1538 = vadd.f32 %v1521, %v1530
        %v1539 = vmax.f32 %v1531, 0.0
        %v1540 = vmax.f32 %v1532, 0.0
        %v1541 = vmax.f32 %v1533, 0.0
        %v1542 = vmax.f32 %v1534, 0.0
        %v1543 = vmax.f32 %v1535, 0.0
        %v1544 = vmax.f32 %v1536, 0.0
        %v1545 = vmax.f32 %v1537, 0.0
        %v1546 = vmax.f32 %v1538, 0.0
        %v1547 = vpack.c.bf16 %v1539, %v1539
        %v1548 = vpack.c.bf16 %v1540, %v1540
        %v1549 = vpack.c.bf16 %v1541, %v1541
        %v1550 = vpack.c.bf16 %v1542, %v1542
        %v1551 = vpack.c.bf16 %v1543, %v1543
        %v1552 = vpack.c.bf16 %v1544, %v1544
        %v1553 = vpack.c.bf16 %v1545, %v1545
        %v1554 = vpack.c.bf16 %v1546, %v1546
        %vm1555 = vcmask 257024
        %1556 = vst.msk [vmem:[%s297] sm:$0xf] %vm1555, %v1547
        %1557 = vst.msk [vmem:[%s297 + $0x4] sm:$0xf] %vm1555, %v1548
        %1558 = vst.msk [vmem:[%s297 + $0x8] sm:$0xf] %vm1555, %v1549
        %1559 = vst.msk [vmem:[%s297 + $0xc] sm:$0xf] %vm1555, %v1550
        %1560 = vst.msk [vmem:[%s297 + $0x10] sm:$0xf] %vm1555, %v1551
        %1561 = vst.msk [vmem:[%s297 + $0x14] sm:$0xf] %vm1555, %v1552
        %1562 = vst.msk [vmem:[%s297 + $0x18] sm:$0xf] %vm1555, %v1553
        %1563 = vst.msk [vmem:[%s297 + $0x1c] sm:$0xf] %vm1555, %v1554
        %s1564 = smul.u32 8, %s19
        %p1565 = scmp.lt.s32.totalorder %s1564, 15
        %s1566 = scalar_select %p1565, %s1564, 15
        %s1567 = smul.addr %s1566, 4
        %s1568 = scalar_lea.vmem %s7, %s1567
        // Predicated region
        $region53: #{tpu_custom_call.1} parent=47 // pred_check
          %p1569 = pneg %p189
        $region54: #{tpu_custom_call.1} parent=47 // pred_check_branch
          %1571 = sbr.rel (%p1569) target = $region56
        $region55: #{tpu_custom_call.1} parent=47 // pred_region
          %s1572 = smul.u32 8, %s19
        $region56: #{tpu_custom_call.1} parent=47 // pred_fallthru
          _
      $region48: #{tpu_custom_call.1} parent=5 // pred_fallthru
        _
      %p1573 = scmp.le.s32.totalorder 2, %s14
      // Predicated region
      $region57: #{tpu_custom_call.1} parent=5 // pred_check
        %p1574 = pneg %p1573
      $region58: #{tpu_custom_call.1} parent=5 // pred_check_branch
        %1576 = sbr.rel (%p1574) target = $region60
      $region59: #{tpu_custom_call.1} parent=5 // pred_region
        %s1577 = ssub.s32 %s14, 2
        // Predicated region
        $region61: #{tpu_custom_call.1} parent=59 // pred_check
          %p1578 = pneg %p195
        $region62: #{tpu_custom_call.1} parent=59 // pred_check_branch
          %1580 = sbr.rel (%p1578) target = $region64
        $region63: #{tpu_custom_call.1} parent=59 // pred_region
          %s1581 = smul.u32 8, %s20
          %p1582 = scmp.lt.s32.totalorder %s1581, 15
          %s1583 = scalar_select %p1582, %s1581, 15
          %s1584 = smul.addr %s1583, 4
          %s1585 = scalar_lea.vmem %s7, %s1584
        $region64: #{tpu_custom_call.1} parent=59 // pred_fallthru
          _
      $region60: #{tpu_custom_call.1} parent=5 // pred_fallthru
        _
    $region6: #{tpu_custom_call.1} parent=1 // loop_footer
      %s18 = sadd.s32 1, %s14
    $region7: #{tpu_custom_call.1} parent=1 // loop_footer_branch
      %13 = sbr.rel target = $region3
    $region8: #{tpu_custom_call.1} parent=1 // loop_exit
      _
    %1586 = vsyncpa [#allocation3], 1
    %s1587 = scalar_lea.sflag [#allocation3], 1
    %1588 = vsyncpa %s1587, 1

</llo_original>
